<compile_context>
chip_gen: v7x
topology: tpu7x:2x2x1
jax: 0.10.0
libtpu: 0.0.40
codegen_flags: <defaults>
</compile_context>

<pallas_src>
import jax
import jax.numpy as jnp
from jax.experimental import pallas as pl
from jax.experimental.pallas import tpu as pltpu


def _attention_pool_kernel(x_ref, pos0_ref, posr_ref,
                           wqkv_ref, bqkv_ref, wkv_ref, bkv_ref,
                           wc_ref, bc_ref, hsum_ref, hexp_ref, o_ref):
    B, HW, C = x_ref.shape
    num_heads = hsum_ref.shape[1]
    head_dim = C // num_heads
    scale = 1.0 / float(head_dim) ** 0.5

    xs = x_ref[...]                                        # (B, HW, C)

    # "class" token = mean over spatial tokens, then add positional embedding.
    mean_tok = jnp.mean(xs, axis=1)                        # (B, C)
    tok0 = mean_tok + pos0_ref[...]                        # (B, C)
    toks = xs + posr_ref[...][None]                        # (B, HW, C)

    # ---- projections (fused weights, big-M MXU matmuls) --------------------
    qkv0 = jnp.dot(tok0, wqkv_ref[...],
                   preferred_element_type=jnp.float32) + bqkv_ref[...]   # (B, 3C)
    q = qkv0[:, :C] * scale                                # (B, C)
    k0 = qkv0[:, C:2 * C]                                  # (B, C)
    v0 = qkv0[:, 2 * C:]                                   # (B, C)

    toks_flat = toks.reshape(B * HW, C)
    kv = jnp.dot(toks_flat, wkv_ref[...],
                 preferred_element_type=jnp.float32) + bkv_ref[...]      # (B*HW, 2C)
    ks_flat = kv[:, :C]                                    # (B*HW, C)
    vs_flat = kv[:, C:]                                    # (B*HW, C)

    # ---- per-head logits via head-sum matmul (no per-head loop) ------------
    hsum = hsum_ref[...]                                   # (C, H) 0/1 indicator
    hexp = hexp_ref[...]                                   # (H, C) 0/1 indicator

    prod_s = ks_flat.reshape(B, HW, C) * q[:, None, :]     # (B, HW, C)
    logit_s = jnp.dot(prod_s.reshape(B * HW, C), hsum,
                      preferred_element_type=jnp.float32).reshape(B, HW, num_heads)
    logit_0 = jnp.dot(k0 * q, hsum,
                      preferred_element_type=jnp.float32)  # (B, H)

    # ---- softmax over the HW+1 keys (class-token key kept separate) --------
    m = jnp.maximum(jnp.max(logit_s, axis=1), logit_0)     # (B, H)
    p0 = jnp.exp(logit_0 - m)                              # (B, H)
    ps = jnp.exp(logit_s - m[:, None, :])                  # (B, HW, H)
    denom = p0 + jnp.sum(ps, axis=1)                       # (B, H)
    inv = pl.reciprocal(denom, approx=True)                # (B, H)  (EUP)
    p0 = p0 * inv
    ps = ps * inv[:, None, :]

    # ---- weighted values: expand per-head probs across head_dim lanes ------
    ps_exp = jnp.dot(ps.reshape(B * HW, num_heads), hexp,
                     preferred_element_type=jnp.float32)   # (B*HW, C)
    p0_exp = jnp.dot(p0, hexp,
                     preferred_element_type=jnp.float32)   # (B, C)

    attn = jnp.sum((ps_exp * vs_flat).reshape(B, HW, C), axis=1)   # (B, C)
    attn = attn + p0_exp * v0                                      # (B, C)

    # ---- output projection (single matmul for all heads / all rows) --------
    out = jnp.dot(attn.astype(wc_ref.dtype), wc_ref[...],
                  preferred_element_type=jnp.float32) + bc_ref[...]  # (B, out)
    o_ref[...] = out.astype(o_ref.dtype)


def attention_pool_2d(x, params, num_heads, *, batch_tile=8,
                      compute_dtype=jnp.float32):
    """x: (N, C, H, W) like the PyTorch module.  Returns (N, out_dim)."""
    N, C, H, W = x.shape
    HW = H * W
    assert C % num_heads == 0
    head_dim = C // num_heads
    out_dim = params["wc"].shape[0]
    cdt = compute_dtype

    # NCHW -> (N, HW, C) token layout (fuses with a conv producer under jit).
    x_seq = jnp.transpose(x.reshape(N, C, HW), (0, 2, 1)).astype(cdt)

    # Batch tile: multiple of 8 so the 2-D output block is sublane-aligned.
    bt = max(8, (int(batch_tile) // 8) * 8)
    n_pad = (-N) % bt
    if n_pad:
        x_seq = jnp.pad(x_seq, ((0, n_pad), (0, 0), (0, 0)))
    Np = N + n_pad
    grid = (Np // bt,)

    # Parameter prep: fused, pre-transposed projection weights.
    pos = params["pos"].astype(cdt)                        # (HW+1, C)
    pos0, posr = pos[:1], pos[1:]
    wqkv = jnp.concatenate(
        [params["wq"].T, params["wk"].T, params["wv"].T], axis=1).astype(cdt)   # (C, 3C)
    bqkv = jnp.concatenate(
        [params["bq"], params["bk"], params["bv"]]).reshape(1, 3 * C).astype(jnp.float32)
    wkv = jnp.concatenate([params["wk"].T, params["wv"].T], axis=1).astype(cdt)  # (C, 2C)
    bkv = jnp.concatenate([params["bk"], params["bv"]]).reshape(1, 2 * C).astype(jnp.float32)
    wc_t = params["wc"].T.astype(cdt)                      # (C, out_dim)
    bc = params["bc"].reshape(1, out_dim).astype(jnp.float32)

    # Head indicator matrices: hsum reduces lanes per head on the MXU,
    # hexp broadcasts per-head scalars back across head_dim lanes.
    head_ids = jnp.arange(C) // head_dim
    hsum = (head_ids[:, None] == jnp.arange(num_heads)[None, :]).astype(jnp.float32)  # (C, H)
    hexp = hsum.T                                                                     # (H, C)

    # Explicit VMEM budget: weights + double-buffered x/out blocks + scratch.
    operands = (pos0, posr, wqkv, bqkv, wkv, bkv, wc_t, bc, hsum, hexp)
    weight_bytes = sum(int(a.size) * a.dtype.itemsize for a in operands)
    block_bytes = bt * HW * C * 4 + bt * out_dim * 4
    scratch_bytes = bt * HW * (2 * C + 2 * num_heads) * 4 + (1 << 20)
    vmem_limit = int(min(64 * 2**20,
                         max(16 * 2**20,
                             2 * weight_bytes + 2 * block_bytes + scratch_bytes)))

    full2 = lambda n: (0, 0)  # noqa: E731  (whole-array operands, constant block)
    out = pl.pallas_call(
        _attention_pool_kernel,
        out_shape=jax.ShapeDtypeStruct((Np, out_dim), x.dtype),
        grid_spec=pltpu.PrefetchScalarGridSpec(
            num_scalar_prefetch=0,
            grid=grid,
            in_specs=[
                pl.BlockSpec((bt, HW, C), lambda n: (n, 0, 0)),   # x tokens
                pl.BlockSpec((1, C), full2),                      # pos[0]
                pl.BlockSpec((HW, C), full2),                     # pos[1:]
                pl.BlockSpec((C, 3 * C), full2),                  # [Wq|Wk|Wv]^T
                pl.BlockSpec((1, 3 * C), full2),                  # [bq|bk|bv]
                pl.BlockSpec((C, 2 * C), full2),                  # [Wk|Wv]^T
                pl.BlockSpec((1, 2 * C), full2),                  # [bk|bv]
                pl.BlockSpec((C, out_dim), full2),                # Wc^T
                pl.BlockSpec((1, out_dim), full2),                # bc
                pl.BlockSpec((C, num_heads), full2),              # head-sum indicator
                pl.BlockSpec((num_heads, C), full2),              # head-expand indicator
            ],
            out_specs=pl.BlockSpec((bt, out_dim), lambda n: (n, 0)),
        ),
        compiler_params=pltpu.CompilerParams(
            dimension_semantics=("parallel",),      # shards batch tiles across TCs
            vmem_limit_bytes=vmem_limit,
        ),
    )(x_seq, pos0, posr, wqkv, bqkv, wkv, bkv, wc_t, bc, hsum, hexp)

    return out[:N]


def _reference_forward(x, params, num_heads):
    """Pure-JAX reference mirroring F.multi_head_attention_forward semantics."""
    N, C, H, W = x.shape
    hd = C // num_heads
    xs = jnp.transpose(x.reshape(N, C, H * W), (0, 2, 1))      # (N, HW, C)
    mean = xs.mean(axis=1, keepdims=True)
    seq = jnp.concatenate([mean, xs], axis=1) + params["pos"][None]  # (N, L, C)
    q = seq[:, :1] @ params["wq"].T + params["bq"]
    k = seq @ params["wk"].T + params["bk"]
    v = seq @ params["wv"].T + params["bv"]
    qh = q.reshape(N, 1, num_heads, hd).transpose(0, 2, 1, 3)
    kh = k.reshape(N, -1, num_heads, hd).transpose(0, 2, 1, 3)
    vh = v.reshape(N, -1, num_heads, hd).transpose(0, 2, 1, 3)
    logits = jnp.einsum("nhqd,nhkd->nhqk", qh, kh) * (1.0 / hd ** 0.5)
    attn = jax.nn.softmax(logits, axis=-1)
    o = jnp.einsum("nhqk,nhkd->nhqd", attn, vh).transpose(0, 2, 1, 3).reshape(N, 1, C)
    return (o @ params["wc"].T + params["bc"])[:, 0]


if __name__ == "__main__":
    # AttentionPool2d(spacial_dim=4, embed_dim=32, num_heads=4, output_dim=16)
    # applied to x of shape (16, 32, 4, 4); batch_tile=8 -> grid=(2,).
    spacial_dim, embed_dim, num_heads, output_dim = 4, 32, 4, 16
    N, H, W = 16, spacial_dim, spacial_dim
    C = embed_dim

    key = jax.random.PRNGKey(0)
    ks = jax.random.split(key, 10)
    params = {
        "pos": jax.random.normal(ks[0], (spacial_dim ** 2 + 1, C), jnp.float32)
               / (C ** 0.5),
        "wq": jax.random.normal(ks[1], (C, C), jnp.float32) * 0.05,
        "bq": jax.random.normal(ks[2], (C,), jnp.float32) * 0.05,
        "wk": jax.random.normal(ks[3], (C, C), jnp.float32) * 0.05,
        "bk": jax.random.normal(ks[4], (C,), jnp.float32) * 0.05,
        "wv": jax.random.normal(ks[5], (C, C), jnp.float32) * 0.05,
        "bv": jax.random.normal(ks[6], (C,), jnp.float32) * 0.05,
        "wc": jax.random.normal(ks[7], (output_dim, C), jnp.float32) * 0.05,
        "bc": jax.random.normal(ks[8], (output_dim,), jnp.float32) * 0.05,
    }
    x = jax.random.normal(ks[9], (N, C, H, W), jnp.float32)

    out = attention_pool_2d(x, params, num_heads, batch_tile=8)
    out = jax.block_until_ready(out)

    ref = _reference_forward(x, params, num_heads)
    assert out.shape == (N, output_dim), out.shape
    # Tolerance covers the approximate EUP reciprocal in the softmax epilogue.
    assert jnp.allclose(out, ref, atol=5e-3, rtol=5e-3), (
        float(jnp.max(jnp.abs(out - ref))))
    print("KERNEL_OK")
</pallas_src>

<mosaic_0001>
module attributes {stable_mosaic.version = 11 : i64} {
  func.func @_attention_pool_kernel(%arg0: i32, %arg1: memref<8x16x32xf32, #tpu.memory_space<vmem>>, %arg2: memref<1x32xf32, #tpu.memory_space<vmem>>, %arg3: memref<16x32xf32, #tpu.memory_space<vmem>>, %arg4: memref<32x96xf32, #tpu.memory_space<vmem>>, %arg5: memref<1x96xf32, #tpu.memory_space<vmem>>, %arg6: memref<32x64xf32, #tpu.memory_space<vmem>>, %arg7: memref<1x64xf32, #tpu.memory_space<vmem>>, %arg8: memref<32x16xf32, #tpu.memory_space<vmem>>, %arg9: memref<1x16xf32, #tpu.memory_space<vmem>>, %arg10: memref<32x4xf32, #tpu.memory_space<vmem>>, %arg11: memref<4x32xf32, #tpu.memory_space<vmem>>, %arg12: memref<8x16xf32, #tpu.memory_space<vmem>>) attributes {dimension_semantics = [#tpu.dimension_semantics<parallel>], iteration_bounds = array<i64: 2>, scalar_prefetch = 0 : i64, scratch_operands = 0 : i64, tpu.core_type = #tpu.core_type<tc>, window_params = [{transform_indices = @transform_0, window_bounds = array<i64: 8, 16, 32>}, {pipeline_mode = #tpu.pipeline_mode<synchronous>, transform_indices = @transform_1, window_bounds = array<i64: 1, 32>}, {pipeline_mode = #tpu.pipeline_mode<synchronous>, transform_indices = @transform_2, window_bounds = array<i64: 16, 32>}, {pipeline_mode = #tpu.pipeline_mode<synchronous>, transform_indices = @transform_3, window_bounds = array<i64: 32, 96>}, {pipeline_mode = #tpu.pipeline_mode<synchronous>, transform_indices = @transform_4, window_bounds = array<i64: 1, 96>}, {pipeline_mode = #tpu.pipeline_mode<synchronous>, transform_indices = @transform_5, window_bounds = array<i64: 32, 64>}, {pipeline_mode = #tpu.pipeline_mode<synchronous>, transform_indices = @transform_6, window_bounds = array<i64: 1, 64>}, {pipeline_mode = #tpu.pipeline_mode<synchronous>, transform_indices = @transform_7, window_bounds = array<i64: 32, 16>}, {pipeline_mode = #tpu.pipeline_mode<synchronous>, transform_indices = @transform_8, window_bounds = array<i64: 1, 16>}, {pipeline_mode = #tpu.pipeline_mode<synchronous>, transform_indices = @transform_9, window_bounds = array<i64: 32, 4>}, {pipeline_mode = #tpu.pipeline_mode<synchronous>, transform_indices = @transform_10, window_bounds = array<i64: 4, 32>}, {transform_indices = @transform_11, window_bounds = array<i64: 8, 16>}]} {
    %c0 = arith.constant 0 : index
    %c0_0 = arith.constant 0 : index
    %c0_1 = arith.constant 0 : index
    %0 = vector.load %arg1[%c0, %c0_0, %c0_1] : memref<8x16x32xf32, #tpu.memory_space<vmem>>, vector<8x16x32xf32>
    %cst = arith.constant dense<0.000000e+00> : vector<8x32xf32>
    %1 = vector.multi_reduction <add>, %0, %cst [1] : vector<8x16x32xf32> to vector<8x32xf32>
    %cst_2 = arith.constant 1.600000e+01 : f32
    %2 = vector.broadcast %cst_2 : f32 to vector<8x32xf32>
    %3 = arith.divf %1, %2 : vector<8x32xf32>
    %c0_3 = arith.constant 0 : index
    %c0_4 = arith.constant 0 : index
    %4 = vector.load %arg2[%c0_3, %c0_4] : memref<1x32xf32, #tpu.memory_space<vmem>>, vector<1x32xf32>
    %5 = vector.broadcast %4 : vector<1x32xf32> to vector<8x32xf32>
    %6 = arith.addf %3, %5 : vector<8x32xf32>
    %c0_5 = arith.constant 0 : index
    %c0_6 = arith.constant 0 : index
    %7 = vector.load %arg3[%c0_5, %c0_6] : memref<16x32xf32, #tpu.memory_space<vmem>>, vector<16x32xf32>
    %8 = vector.shape_cast %7 : vector<16x32xf32> to vector<1x16x32xf32>
    %9 = vector.broadcast %8 : vector<1x16x32xf32> to vector<8x16x32xf32>
    %10 = arith.addf %0, %9 : vector<8x16x32xf32>
    %c0_7 = arith.constant 0 : index
    %c0_8 = arith.constant 0 : index
    %11 = vector.load %arg4[%c0_7, %c0_8] : memref<32x96xf32, #tpu.memory_space<vmem>>, vector<32x96xf32>
    %cst_9 = arith.constant dense<0.000000e+00> : vector<8x96xf32>
    %12 = tpu.matmul %6, %11, %cst_9 {dimension_numbers = #tpu.dot_dimension_numbers<[1], [0], [0], [1], [0, 0, 1, 1], [], []>} : vector<8x32xf32>, vector<32x96xf32>, vector<8x96xf32> -> vector<8x96xf32>
    %c0_10 = arith.constant 0 : index
    %c0_11 = arith.constant 0 : index
    %13 = vector.load %arg5[%c0_10, %c0_11] : memref<1x96xf32, #tpu.memory_space<vmem>>, vector<1x96xf32>
    %14 = vector.broadcast %13 : vector<1x96xf32> to vector<8x96xf32>
    %15 = arith.addf %12, %14 : vector<8x96xf32>
    %16 = vector.extract_strided_slice %15 {offsets = [0, 0], sizes = [8, 32], strides = [1, 1]} : vector<8x96xf32> to vector<8x32xf32>
    %cst_12 = arith.constant 0.353553385 : f32
    %17 = vector.broadcast %cst_12 : f32 to vector<8x32xf32>
    %18 = arith.mulf %16, %17 : vector<8x32xf32>
    %19 = vector.extract_strided_slice %15 {offsets = [0, 32], sizes = [8, 32], strides = [1, 1]} : vector<8x96xf32> to vector<8x32xf32>
    %20 = vector.extract_strided_slice %15 {offsets = [0, 64], sizes = [8, 32], strides = [1, 1]} : vector<8x96xf32> to vector<8x32xf32>
    %21 = vector.shape_cast %10 : vector<8x16x32xf32> to vector<128x32xf32>
    %c0_13 = arith.constant 0 : index
    %c0_14 = arith.constant 0 : index
    %22 = vector.load %arg6[%c0_13, %c0_14] : memref<32x64xf32, #tpu.memory_space<vmem>>, vector<32x64xf32>
    %cst_15 = arith.constant dense<0.000000e+00> : vector<128x64xf32>
    %23 = tpu.matmul %21, %22, %cst_15 {dimension_numbers = #tpu.dot_dimension_numbers<[1], [0], [0], [1], [0, 0, 1, 1], [], []>} : vector<128x32xf32>, vector<32x64xf32>, vector<128x64xf32> -> vector<128x64xf32>
    %c0_16 = arith.constant 0 : index
    %c0_17 = arith.constant 0 : index
    %24 = vector.load %arg7[%c0_16, %c0_17] : memref<1x64xf32, #tpu.memory_space<vmem>>, vector<1x64xf32>
    %25 = vector.broadcast %24 : vector<1x64xf32> to vector<128x64xf32>
    %26 = arith.addf %23, %25 : vector<128x64xf32>
    %27 = vector.extract_strided_slice %26 {offsets = [0, 0], sizes = [128, 32], strides = [1, 1]} : vector<128x64xf32> to vector<128x32xf32>
    %28 = vector.extract_strided_slice %26 {offsets = [0, 32], sizes = [128, 32], strides = [1, 1]} : vector<128x64xf32> to vector<128x32xf32>
    %c0_18 = arith.constant 0 : index
    %c0_19 = arith.constant 0 : index
    %29 = vector.load %arg10[%c0_18, %c0_19] : memref<32x4xf32, #tpu.memory_space<vmem>>, vector<32x4xf32>
    %c0_20 = arith.constant 0 : index
    %c0_21 = arith.constant 0 : index
    %30 = vector.load %arg11[%c0_20, %c0_21] : memref<4x32xf32, #tpu.memory_space<vmem>>, vector<4x32xf32>
    %31 = vector.shape_cast %27 : vector<128x32xf32> to vector<8x16x32xf32>
    %32 = vector.shape_cast %18 : vector<8x32xf32> to vector<8x1x32xf32>
    %33 = vector.broadcast %32 : vector<8x1x32xf32> to vector<8x16x32xf32>
    %34 = arith.mulf %31, %33 : vector<8x16x32xf32>
    %35 = vector.shape_cast %34 : vector<8x16x32xf32> to vector<128x32xf32>
    %cst_22 = arith.constant dense<0.000000e+00> : vector<128x4xf32>
    %36 = tpu.matmul %35, %29, %cst_22 {dimension_numbers = #tpu.dot_dimension_numbers<[1], [0], [0], [1], [0, 0, 1, 1], [], []>} : vector<128x32xf32>, vector<32x4xf32>, vector<128x4xf32> -> vector<128x4xf32>
    %37 = vector.shape_cast %36 : vector<128x4xf32> to vector<8x16x4xf32>
    %38 = arith.mulf %19, %18 : vector<8x32xf32>
    %cst_23 = arith.constant dense<0.000000e+00> : vector<8x4xf32>
    %39 = tpu.matmul %38, %29, %cst_23 {dimension_numbers = #tpu.dot_dimension_numbers<[1], [0], [0], [1], [0, 0, 1, 1], [], []>} : vector<8x32xf32>, vector<32x4xf32>, vector<8x4xf32> -> vector<8x4xf32>
    %cst_24 = arith.constant dense<0xFF800000> : vector<8x4xf32>
    %40 = vector.multi_reduction <maximumf>, %37, %cst_24 [1] : vector<8x16x4xf32> to vector<8x4xf32>
    %41 = arith.maximumf %40, %39 : vector<8x4xf32>
    %42 = arith.subf %39, %41 : vector<8x4xf32>
    %43 = math.exp %42 : vector<8x4xf32>
    %44 = vector.shape_cast %41 : vector<8x4xf32> to vector<8x1x4xf32>
    %45 = vector.broadcast %44 : vector<8x1x4xf32> to vector<8x16x4xf32>
    %46 = arith.subf %37, %45 : vector<8x16x4xf32>
    %47 = math.exp %46 : vector<8x16x4xf32>
    %cst_25 = arith.constant dense<0.000000e+00> : vector<8x4xf32>
    %48 = vector.multi_reduction <add>, %47, %cst_25 [1] : vector<8x16x4xf32> to vector<8x4xf32>
    %49 = arith.addf %43, %48 : vector<8x4xf32>
    %50 = tpu.reciprocal %49 {approx = true} : vector<8x4xf32> -> vector<8x4xf32>
    %51 = arith.mulf %43, %50 : vector<8x4xf32>
    %52 = vector.shape_cast %50 : vector<8x4xf32> to vector<8x1x4xf32>
    %53 = vector.broadcast %52 : vector<8x1x4xf32> to vector<8x16x4xf32>
    %54 = arith.mulf %47, %53 : vector<8x16x4xf32>
    %55 = vector.shape_cast %54 : vector<8x16x4xf32> to vector<128x4xf32>
    %cst_26 = arith.constant dense<0.000000e+00> : vector<128x32xf32>
    %56 = tpu.matmul %55, %30, %cst_26 {dimension_numbers = #tpu.dot_dimension_numbers<[1], [0], [0], [1], [0, 0, 1, 1], [], []>} : vector<128x4xf32>, vector<4x32xf32>, vector<128x32xf32> -> vector<128x32xf32>
    %cst_27 = arith.constant dense<0.000000e+00> : vector<8x32xf32>
    %57 = tpu.matmul %51, %30, %cst_27 {dimension_numbers = #tpu.dot_dimension_numbers<[1], [0], [0], [1], [0, 0, 1, 1], [], []>} : vector<8x4xf32>, vector<4x32xf32>, vector<8x32xf32> -> vector<8x32xf32>
    %58 = arith.mulf %56, %28 : vector<128x32xf32>
    %59 = vector.shape_cast %58 : vector<128x32xf32> to vector<8x16x32xf32>
    %cst_28 = arith.constant dense<0.000000e+00> : vector<8x32xf32>
    %60 = vector.multi_reduction <add>, %59, %cst_28 [1] : vector<8x16x32xf32> to vector<8x32xf32>
    %61 = arith.mulf %57, %20 : vector<8x32xf32>
    %62 = arith.addf %60, %61 : vector<8x32xf32>
    %c0_29 = arith.constant 0 : index
    %c0_30 = arith.constant 0 : index
    %63 = vector.load %arg8[%c0_29, %c0_30] : memref<32x16xf32, #tpu.memory_space<vmem>>, vector<32x16xf32>
    %cst_31 = arith.constant dense<0.000000e+00> : vector<8x16xf32>
    %64 = tpu.matmul %62, %63, %cst_31 {dimension_numbers = #tpu.dot_dimension_numbers<[1], [0], [0], [1], [0, 0, 1, 1], [], []>} : vector<8x32xf32>, vector<32x16xf32>, vector<8x16xf32> -> vector<8x16xf32>
    %c0_32 = arith.constant 0 : index
    %c0_33 = arith.constant 0 : index
    %65 = vector.load %arg9[%c0_32, %c0_33] : memref<1x16xf32, #tpu.memory_space<vmem>>, vector<1x16xf32>
    %66 = vector.broadcast %65 : vector<1x16xf32> to vector<8x16xf32>
    %67 = arith.addf %64, %66 : vector<8x16xf32>
    %c0_34 = arith.constant 0 : index
    %c0_35 = arith.constant 0 : index
    %68 = vector.load %arg12[%c0_34, %c0_35] : memref<8x16xf32, #tpu.memory_space<vmem>>, vector<8x16xf32>
    tpu.vector_store %arg12[%c0_34, %c0_35], %67 {strides = array<i32>} : memref<8x16xf32, #tpu.memory_space<vmem>>, vector<8x16xf32>,
    return
  }
  func.func @transform_0(%arg0: i32) -> (i32, i32, i32) {
    %c0_i32 = arith.constant 0 : i32
    %c0_i32_0 = arith.constant 0 : i32
    %c0_i32_1 = arith.constant 0 : i32
    return %arg0, %c0_i32, %c0_i32_0 : i32, i32, i32
  }
  func.func @transform_1(%arg0: i32) -> (i32, i32) {
    %c0_i32 = arith.constant 0 : i32
    %c0_i32_0 = arith.constant 0 : i32
    %c0_i32_1 = arith.constant 0 : i32
    return %c0_i32, %c0_i32_0 : i32, i32
  }
  func.func @transform_2(%arg0: i32) -> (i32, i32) {
    %c0_i32 = arith.constant 0 : i32
    %c0_i32_0 = arith.constant 0 : i32
    %c0_i32_1 = arith.constant 0 : i32
    return %c0_i32, %c0_i32_0 : i32, i32
  }
  func.func @transform_3(%arg0: i32) -> (i32, i32) {
    %c0_i32 = arith.constant 0 : i32
    %c0_i32_0 = arith.constant 0 : i32
    %c0_i32_1 = arith.constant 0 : i32
    return %c0_i32, %c0_i32_0 : i32, i32
  }
  func.func @transform_4(%arg0: i32) -> (i32, i32) {
    %c0_i32 = arith.constant 0 : i32
    %c0_i32_0 = arith.constant 0 : i32
    %c0_i32_1 = arith.constant 0 : i32
    return %c0_i32, %c0_i32_0 : i32, i32
  }
  func.func @transform_5(%arg0: i32) -> (i32, i32) {
    %c0_i32 = arith.constant 0 : i32
    %c0_i32_0 = arith.constant 0 : i32
    %c0_i32_1 = arith.constant 0 : i32
    return %c0_i32, %c0_i32_0 : i32, i32
  }
  func.func @transform_6(%arg0: i32) -> (i32, i32) {
    %c0_i32 = arith.constant 0 : i32
    %c0_i32_0 = arith.constant 0 : i32
    %c0_i32_1 = arith.constant 0 : i32
    return %c0_i32, %c0_i32_0 : i32, i32
  }
  func.func @transform_7(%arg0: i32) -> (i32, i32) {
    %c0_i32 = arith.constant 0 : i32
    %c0_i32_0 = arith.constant 0 : i32
    %c0_i32_1 = arith.constant 0 : i32
    return %c0_i32, %c0_i32_0 : i32, i32
  }
  func.func @transform_8(%arg0: i32) -> (i32, i32) {
    %c0_i32 = arith.constant 0 : i32
    %c0_i32_0 = arith.constant 0 : i32
    %c0_i32_1 = arith.constant 0 : i32
    return %c0_i32, %c0_i32_0 : i32, i32
  }
  func.func @transform_9(%arg0: i32) -> (i32, i32) {
    %c0_i32 = arith.constant 0 : i32
    %c0_i32_0 = arith.constant 0 : i32
    %c0_i32_1 = arith.constant 0 : i32
    return %c0_i32, %c0_i32_0 : i32, i32
  }
  func.func @transform_10(%arg0: i32) -> (i32, i32) {
    %c0_i32 = arith.constant 0 : i32
    %c0_i32_0 = arith.constant 0 : i32
    %c0_i32_1 = arith.constant 0 : i32
    return %c0_i32, %c0_i32_0 : i32, i32
  }
  func.func @transform_11(%arg0: i32) -> (i32, i32) {
    %c0_i32 = arith.constant 0 : i32
    %c0_i32_0 = arith.constant 0 : i32
    return %arg0, %c0_i32 : i32, i32
  }
}

</mosaic_0001>

<llo_original>
// kernel: tpu_custom_call.1
$region0: #{tpu_custom_call.1}
  #allocation0 [shape = 'u32[]', space=smem, size = 0x4, offset = 0x4, fixed_abs, tag = 'smem constant byte address 0x4 - core index']
  #allocation1 [shape = 'u32[144,128]{1,0:T(1,128)}', space=vmem, size = 0x12000, scoped, tag = 'internal scratch']
  %s0 = inlined_call_operand.hbm [shape: f32[16,16,32], index: 0, kind: input, shape index: {}]
  %s1 = inlined_call_operand.vmem [shape: f32[1,32], index: 1, kind: input, shape index: {}]
  %s2 = inlined_call_operand.vmem [shape: f32[16,32], index: 2, kind: input, shape index: {}]
  %s3 = inlined_call_operand.vmem [shape: f32[32,96], index: 3, kind: input, shape index: {}]
  %s4 = inlined_call_operand.vmem [shape: f32[1,96], index: 4, kind: input, shape index: {}]
  %s5 = inlined_call_operand.vmem [shape: f32[32,64], index: 5, kind: input, shape index: {}]
  %s6 = inlined_call_operand.vmem [shape: f32[1,64], index: 6, kind: input, shape index: {}]
  %s7 = inlined_call_operand.vmem [shape: f32[32,16], index: 7, kind: input, shape index: {}]
  %s8 = inlined_call_operand.vmem [shape: f32[1,16], index: 8, kind: input, shape index: {}]
  %s9 = inlined_call_operand.vmem [shape: f32[32,4], index: 9, kind: input, shape index: {}]
  %s10 = inlined_call_operand.vmem [shape: f32[4,32], index: 10, kind: input, shape index: {}]
  %s11 = inlined_call_operand.hbm [shape: f32[16,16], index: 11, kind: output, shape index: {}]
  %s12 = sld [smem:[#allocation0]]
  $region81: #{tpu_custom_call.1} parent=0
    _
  %s14 = ssub.s32 1, %s12
  %s15 = scalar_select 0, %s14, %s12
  $region1: #{tpu_custom_call.1} parent=0
    #allocation2 [shape = 'u8[131072]{0}', space=vmem, size = 0x20000, scoped, tag = 'input window, operand 0']
    #allocation3 [shape = 's32[2]{0}', space=sflag, size = 0x8, scoped, tag = 'scoped memory for tpu_custom_call.1']
    #allocation4 [shape = 's32[2]{0}', space=sflag, size = 0x8, scoped, tag = 'scoped memory for tpu_custom_call.1']
    #allocation5 [shape = 'u8[8192]{0}', space=vmem, size = 0x2000, scoped, tag = 'output window, operand 0']
    %16 = vsyncpa [#allocation3], 0
    %s17 = scalar_lea.sflag [#allocation3], 1
    %18 = vsyncpa %s17, 0
    %19 = vsyncpa [#allocation4], 0
    %s20 = scalar_lea.sflag [#allocation4], 1
    %21 = vsyncpa %s20, 0
    loop: start=0, step=1, limit=4
    $region2: #{tpu_custom_call.1} parent=1 // loop_pre_header
      _
    $region3: #{tpu_custom_call.1} parent=1 // loop_header
      %s23 = sphi 0, %s27
      %p24 = scmp.ge.s32.totalorder %s23, 4
      %s33 = sphi 0, %s35
      %s36 = sphi 0, %s33
      %s37 = sphi 0, %s36
      %s53 = sphi 0, %s37
      %s57 = sphi 0, %s57
      %s59 = sphi 0, %s57
      %s60 = sphi 0, %s59
      %s74 = sphi 0, %s60
      %s78 = sphi 0, %s78
      %s80 = sphi 0, %s78
      %s81 = sphi 0, %s80
      %s95 = sphi 0, %s81
      %s99 = sphi 0, %s99
      %s101 = sphi 0, %s99
      %s102 = sphi 0, %s101
      %s116 = sphi 0, %s102
      %s120 = sphi 0, %s120
      %s122 = sphi 0, %s120
      %s123 = sphi 0, %s122
      %s137 = sphi 0, %s123
      %s141 = sphi 0, %s141
      %s143 = sphi 0, %s141
      %s144 = sphi 0, %s143
      %s158 = sphi 0, %s144
      %s162 = sphi 0, %s162
      %s164 = sphi 0, %s162
      %s165 = sphi 0, %s164
      %s179 = sphi 0, %s165
      %s183 = sphi 0, %s183
      %s185 = sphi 0, %s183
      %s186 = sphi 0, %s185
      %s200 = sphi 0, %s186
      %s204 = sphi 0, %s204
      %s206 = sphi 0, %s204
      %s207 = sphi 0, %s206
      %s221 = sphi 0, %s207
      %s225 = sphi 0, %s225
      %s227 = sphi 0, %s225
      %s228 = sphi 0, %s227
      %s242 = sphi 0, %s228
      %s246 = sphi 0, %s246
      %s248 = sphi 0, %s246
      %s249 = sphi 0, %s248
      %s263 = sphi 0, %s249
      %s269 = sphi 0, %s271
      %s272 = sphi 0, %s269
      %s273 = sphi 0, %s272
      %s289 = sphi 0, %s273
    $region4: #{tpu_custom_call.1} parent=1 // loop_header_branch
      %26 = sbr.rel (%p24) target = $region8
    $region5: #{tpu_custom_call.1} parent=1 // loop_body
      %s28 = ssub.s32 %s23, 1
      %s29 = ssub.s32 %s23, 2
      %s30 = sadd.s32 %s23, 1
      %s31 = ssub.s32 %s23, %s30
      %p32 = scmp.eq.s32.totalorder %s31, 0
      %s34 = sadd.s32 %s33, 1
      %s35 = scalar_select %p32, %s33, %s34
      %p38 = pneg %p32
      %p39 = scmp.eq.s32.totalorder %s23, 1
      %p40 = por %p38, %p39
      %p41 = scmp.ne.s32.totalorder %s33, %s36
      %p42 = scmp.eq.s32.totalorder %s23, 0
      %p43 = por %p41, %p42
      %p44 = scmp.ne.s32.totalorder %s33, %s36
      %p45 = scmp.eq.s32.totalorder %s28, 1
      %p46 = por %p44, %p45
      %p47 = scmp.ne.s32.totalorder %s36, %s37
      %p48 = scmp.eq.s32.totalorder %s28, 0
      %p49 = por %p47, %p48
      %p50 = scmp.ne.s32.totalorder %s36, %s37
      %p51 = scmp.eq.s32.totalorder %s29, 1
      %p52 = por %p50, %p51
      %p54 = scmp.ne.s32.totalorder %s37, %s53
      %p55 = scmp.eq.s32.totalorder %s29, 0
      %p56 = por %p54, %p55
      %s58 = sadd.s32 %s57, 1
      %p61 = scmp.eq.s32.totalorder %s23, 1
      %p62 = scmp.ne.s32.totalorder %s57, %s59
      %p63 = scmp.eq.s32.totalorder %s23, 0
      %p64 = por %p62, %p63
      %p65 = scmp.ne.s32.totalorder %s57, %s59
      %p66 = scmp.eq.s32.totalorder %s28, 1
      %p67 = por %p65, %p66
      %p68 = scmp.ne.s32.totalorder %s59, %s60
      %p69 = scmp.eq.s32.totalorder %s28, 0
      %p70 = por %p68, %p69
      %p71 = scmp.ne.s32.totalorder %s59, %s60
      %p72 = scmp.eq.s32.totalorder %s29, 1
      %p73 = por %p71, %p72
      %p75 = scmp.ne.s32.totalorder %s60, %s74
      %p76 = scmp.eq.s32.totalorder %s29, 0
      %p77 = por %p75, %p76
      %s79 = sadd.s32 %s78, 1
      %p82 = scmp.eq.s32.totalorder %s23, 1
      %p83 = scmp.ne.s32.totalorder %s78, %s80
      %p84 = scmp.eq.s32.totalorder %s23, 0
      %p85 = por %p83, %p84
      %p86 = scmp.ne.s32.totalorder %s78, %s80
      %p87 = scmp.eq.s32.totalorder %s28, 1
      %p88 = por %p86, %p87
      %p89 = scmp.ne.s32.totalorder %s80, %s81
      %p90 = scmp.eq.s32.totalorder %s28, 0
      %p91 = por %p89, %p90
      %p92 = scmp.ne.s32.totalorder %s80, %s81
      %p93 = scmp.eq.s32.totalorder %s29, 1
      %p94 = por %p92, %p93
      %p96 = scmp.ne.s32.totalorder %s81, %s95
      %p97 = scmp.eq.s32.totalorder %s29, 0
      %p98 = por %p96, %p97
      %s100 = sadd.s32 %s99, 1
      %p103 = scmp.eq.s32.totalorder %s23, 1
      %p104 = scmp.ne.s32.totalorder %s99, %s101
      %p105 = scmp.eq.s32.totalorder %s23, 0
      %p106 = por %p104, %p105
      %p107 = scmp.ne.s32.totalorder %s99, %s101
      %p108 = scmp.eq.s32.totalorder %s28, 1
      %p109 = por %p107, %p108
      %p110 = scmp.ne.s32.totalorder %s101, %s102
      %p111 = scmp.eq.s32.totalorder %s28, 0
      %p112 = por %p110, %p111
      %p113 = scmp.ne.s32.totalorder %s101, %s102
      %p114 = scmp.eq.s32.totalorder %s29, 1
      %p115 = por %p113, %p114
      %p117 = scmp.ne.s32.totalorder %s102, %s116
      %p118 = scmp.eq.s32.totalorder %s29, 0
      %p119 = por %p117, %p118
      %s121 = sadd.s32 %s120, 1
      %p124 = scmp.eq.s32.totalorder %s23, 1
      %p125 = scmp.ne.s32.totalorder %s120, %s122
      %p126 = scmp.eq.s32.totalorder %s23, 0
      %p127 = por %p125, %p126
      %p128 = scmp.ne.s32.totalorder %s120, %s122
      %p129 = scmp.eq.s32.totalorder %s28, 1
      %p130 = por %p128, %p129
      %p131 = scmp.ne.s32.totalorder %s122, %s123
      %p132 = scmp.eq.s32.totalorder %s28, 0
      %p133 = por %p131, %p132
      %p134 = scmp.ne.s32.totalorder %s122, %s123
      %p135 = scmp.eq.s32.totalorder %s29, 1
      %p136 = por %p134, %p135
      %p138 = scmp.ne.s32.totalorder %s123, %s137
      %p139 = scmp.eq.s32.totalorder %s29, 0
      %p140 = por %p138, %p139
      %s142 = sadd.s32 %s141, 1
      %p145 = scmp.eq.s32.totalorder %s23, 1
      %p146 = scmp.ne.s32.totalorder %s141, %s143
      %p147 = scmp.eq.s32.totalorder %s23, 0
      %p148 = por %p146, %p147
      %p149 = scmp.ne.s32.totalorder %s141, %s143
      %p150 = scmp.eq.s32.totalorder %s28, 1
      %p151 = por %p149, %p150
      %p152 = scmp.ne.s32.totalorder %s143, %s144
      %p153 = scmp.eq.s32.totalorder %s28, 0
      %p154 = por %p152, %p153
      %p155 = scmp.ne.s32.totalorder %s143, %s144
      %p156 = scmp.eq.s32.totalorder %s29, 1
      %p157 = por %p155, %p156
      %p159 = scmp.ne.s32.totalorder %s144, %s158
      %p160 = scmp.eq.s32.totalorder %s29, 0
      %p161 = por %p159, %p160
      %s163 = sadd.s32 %s162, 1
      %p166 = scmp.eq.s32.totalorder %s23, 1
      %p167 = scmp.ne.s32.totalorder %s162, %s164
      %p168 = scmp.eq.s32.totalorder %s23, 0
      %p169 = por %p167, %p168
      %p170 = scmp.ne.s32.totalorder %s162, %s164
      %p171 = scmp.eq.s32.totalorder %s28, 1
      %p172 = por %p170, %p171
      %p173 = scmp.ne.s32.totalorder %s164, %s165
      %p174 = scmp.eq.s32.totalorder %s28, 0
      %p175 = por %p173, %p174
      %p176 = scmp.ne.s32.totalorder %s164, %s165
      %p177 = scmp.eq.s32.totalorder %s29, 1
      %p178 = por %p176, %p177
      %p180 = scmp.ne.s32.totalorder %s165, %s179
      %p181 = scmp.eq.s32.totalorder %s29, 0
      %p182 = por %p180, %p181
      %s184 = sadd.s32 %s183, 1
      %p187 = scmp.eq.s32.totalorder %s23, 1
      %p188 = scmp.ne.s32.totalorder %s183, %s185
      %p189 = scmp.eq.s32.totalorder %s23, 0
      %p190 = por %p188, %p189
      %p191 = scmp.ne.s32.totalorder %s183, %s185
      %p192 = scmp.eq.s32.totalorder %s28, 1
      %p193 = por %p191, %p192
      %p194 = scmp.ne.s32.totalorder %s185, %s186
      %p195 = scmp.eq.s32.totalorder %s28, 0
      %p196 = por %p194, %p195
      %p197 = scmp.ne.s32.totalorder %s185, %s186
      %p198 = scmp.eq.s32.totalorder %s29, 1
      %p199 = por %p197, %p198
      %p201 = scmp.ne.s32.totalorder %s186, %s200
      %p202 = scmp.eq.s32.totalorder %s29, 0
      %p203 = por %p201, %p202
      %s205 = sadd.s32 %s204, 1
      %p208 = scmp.eq.s32.totalorder %s23, 1
      %p209 = scmp.ne.s32.totalorder %s204, %s206
      %p210 = scmp.eq.s32.totalorder %s23, 0
      %p211 = por %p209, %p210
      %p212 = scmp.ne.s32.totalorder %s204, %s206
      %p213 = scmp.eq.s32.totalorder %s28, 1
      %p214 = por %p212, %p213
      %p215 = scmp.ne.s32.totalorder %s206, %s207
      %p216 = scmp.eq.s32.totalorder %s28, 0
      %p217 = por %p215, %p216
      %p218 = scmp.ne.s32.totalorder %s206, %s207
      %p219 = scmp.eq.s32.totalorder %s29, 1
      %p220 = por %p218, %p219
      %p222 = scmp.ne.s32.totalorder %s207, %s221
      %p223 = scmp.eq.s32.totalorder %s29, 0
      %p224 = por %p222, %p223
      %s226 = sadd.s32 %s225, 1
      %p229 = scmp.eq.s32.totalorder %s23, 1
      %p230 = scmp.ne.s32.totalorder %s225, %s227
      %p231 = scmp.eq.s32.totalorder %s23, 0
      %p232 = por %p230, %p231
      %p233 = scmp.ne.s32.totalorder %s225, %s227
      %p234 = scmp.eq.s32.totalorder %s28, 1
      %p235 = por %p233, %p234
      %p236 = scmp.ne.s32.totalorder %s227, %s228
      %p237 = scmp.eq.s32.totalorder %s28, 0
      %p238 = por %p236, %p237
      %p239 = scmp.ne.s32.totalorder %s227, %s228
      %p240 = scmp.eq.s32.totalorder %s29, 1
      %p241 = por %p239, %p240
      %p243 = scmp.ne.s32.totalorder %s228, %s242
      %p244 = scmp.eq.s32.totalorder %s29, 0
      %p245 = por %p243, %p244
      %s247 = sadd.s32 %s246, 1
      %p250 = scmp.eq.s32.totalorder %s23, 1
      %p251 = scmp.ne.s32.totalorder %s246, %s248
      %p252 = scmp.eq.s32.totalorder %s23, 0
      %p253 = por %p251, %p252
      %p254 = scmp.ne.s32.totalorder %s246, %s248
      %p255 = scmp.eq.s32.totalorder %s28, 1
      %p256 = por %p254, %p255
      %p257 = scmp.ne.s32.totalorder %s248, %s249
      %p258 = scmp.eq.s32.totalorder %s28, 0
      %p259 = por %p257, %p258
      %p260 = scmp.ne.s32.totalorder %s248, %s249
      %p261 = scmp.eq.s32.totalorder %s29, 1
      %p262 = por %p260, %p261
      %p264 = scmp.ne.s32.totalorder %s249, %s263
      %p265 = scmp.eq.s32.totalorder %s29, 0
      %p266 = por %p264, %p265
      %s267 = ssub.s32 %s23, %s30
      %p268 = scmp.eq.s32.totalorder %s267, 0
      %s270 = sadd.s32 %s269, 1
      %s271 = scalar_select %p268, %s269, %s270
      %p274 = pneg %p268
      %p275 = scmp.eq.s32.totalorder %s23, 1
      %p276 = por %p274, %p275
      %p277 = scmp.ne.s32.totalorder %s269, %s272
      %p278 = scmp.eq.s32.totalorder %s23, 0
      %p279 = por %p277, %p278
      %p280 = scmp.ne.s32.totalorder %s269, %s272
      %p281 = scmp.eq.s32.totalorder %s28, 1
      %p282 = por %p280, %p281
      %p283 = scmp.ne.s32.totalorder %s272, %s273
      %p284 = scmp.eq.s32.totalorder %s28, 0
      %p285 = por %p283, %p284
      %p286 = scmp.ne.s32.totalorder %s272, %s273
      %p287 = scmp.eq.s32.totalorder %s29, 1
      %p288 = por %p286, %p287
      %p290 = scmp.ne.s32.totalorder %s273, %s289
      %p291 = scmp.eq.s32.totalorder %s29, 0
      %p292 = por %p290, %p291
      %p293 = scmp.le.s32.totalorder 1, %s23
      %p294 = scmp.lt.s32.totalorder %s23, 3
      %p295 = pnand %p293, %p294
      %p296 = pneg %p295
      // Predicated region
      $region9: #{tpu_custom_call.1} parent=5 // pred_check
        _
      $region10: #{tpu_custom_call.1} parent=5 // pred_check_branch
        %298 = sbr.rel (%p295) target = $region12
      $region11: #{tpu_custom_call.1} parent=5 // pred_region
        %s299 = ssub.s32 %s23, 1
        // Predicated region
        $region13: #{tpu_custom_call.1} parent=11 // pred_check
          %p300 = pneg %p70
        $region14: #{tpu_custom_call.1} parent=11 // pred_check_branch
          %302 = sbr.rel (%p300) target = $region16
        $region15: #{tpu_custom_call.1} parent=11 // pred_region
          _
        $region16: #{tpu_custom_call.1} parent=11 // pred_fallthru
          _
        // Predicated region
        $region17: #{tpu_custom_call.1} parent=11 // pred_check
          %p303 = pneg %p91
        $region18: #{tpu_custom_call.1} parent=11 // pred_check_branch
          %305 = sbr.rel (%p303) target = $region20
        $region19: #{tpu_custom_call.1} parent=11 // pred_region
          _
        $region20: #{tpu_custom_call.1} parent=11 // pred_fallthru
          _
        // Predicated region
        $region21: #{tpu_custom_call.1} parent=11 // pred_check
          %p306 = pneg %p112
        $region22: #{tpu_custom_call.1} parent=11 // pred_check_branch
          %308 = sbr.rel (%p306) target = $region24
        $region23: #{tpu_custom_call.1} parent=11 // pred_region
          _
        $region24: #{tpu_custom_call.1} parent=11 // pred_fallthru
          _
        // Predicated region
        $region25: #{tpu_custom_call.1} parent=11 // pred_check
          %p309 = pneg %p133
        $region26: #{tpu_custom_call.1} parent=11 // pred_check_branch
          %311 = sbr.rel (%p309) target = $region28
        $region27: #{tpu_custom_call.1} parent=11 // pred_region
          _
        $region28: #{tpu_custom_call.1} parent=11 // pred_fallthru
          _
        // Predicated region
        $region29: #{tpu_custom_call.1} parent=11 // pred_check
          %p312 = pneg %p154
        $region30: #{tpu_custom_call.1} parent=11 // pred_check_branch
          %314 = sbr.rel (%p312) target = $region32
        $region31: #{tpu_custom_call.1} parent=11 // pred_region
          _
        $region32: #{tpu_custom_call.1} parent=11 // pred_fallthru
          _
        // Predicated region
        $region33: #{tpu_custom_call.1} parent=11 // pred_check
          %p315 = pneg %p175
        $region34: #{tpu_custom_call.1} parent=11 // pred_check_branch
          %317 = sbr.rel (%p315) target = $region36
        $region35: #{tpu_custom_call.1} parent=11 // pred_region
          _
        $region36: #{tpu_custom_call.1} parent=11 // pred_fallthru
          _
        // Predicated region
        $region37: #{tpu_custom_call.1} parent=11 // pred_check
          %p318 = pneg %p196
        $region38: #{tpu_custom_call.1} parent=11 // pred_check_branch
          %320 = sbr.rel (%p318) target = $region40
        $region39: #{tpu_custom_call.1} parent=11 // pred_region
          _
        $region40: #{tpu_custom_call.1} parent=11 // pred_fallthru
          _
        // Predicated region
        $region41: #{tpu_custom_call.1} parent=11 // pred_check
          %p321 = pneg %p217
        $region42: #{tpu_custom_call.1} parent=11 // pred_check_branch
          %323 = sbr.rel (%p321) target = $region44
        $region43: #{tpu_custom_call.1} parent=11 // pred_region
          _
        $region44: #{tpu_custom_call.1} parent=11 // pred_fallthru
          _
        // Predicated region
        $region45: #{tpu_custom_call.1} parent=11 // pred_check
          %p324 = pneg %p238
        $region46: #{tpu_custom_call.1} parent=11 // pred_check_branch
          %326 = sbr.rel (%p324) target = $region48
        $region47: #{tpu_custom_call.1} parent=11 // pred_region
          _
        $region48: #{tpu_custom_call.1} parent=11 // pred_fallthru
          _
        // Predicated region
        $region49: #{tpu_custom_call.1} parent=11 // pred_check
          %p327 = pneg %p259
        $region50: #{tpu_custom_call.1} parent=11 // pred_check_branch
          %329 = sbr.rel (%p327) target = $region52
        $region51: #{tpu_custom_call.1} parent=11 // pred_region
          _
        $region52: #{tpu_custom_call.1} parent=11 // pred_fallthru
          _
      $region12: #{tpu_custom_call.1} parent=5 // pred_fallthru
        _
      %p330 = scmp.lt.s32.totalorder %s23, 2
      // Predicated region
      $region53: #{tpu_custom_call.1} parent=5 // pred_check
        %p331 = pneg %p330
      $region54: #{tpu_custom_call.1} parent=5 // pred_check_branch
        %333 = sbr.rel (%p331) target = $region56
      $region55: #{tpu_custom_call.1} parent=5 // pred_region
        // Predicated region
        $region57: #{tpu_custom_call.1} parent=55 // pred_check
          %p334 = pneg %p43
        $region58: #{tpu_custom_call.1} parent=55 // pred_check_branch
          %336 = sbr.rel (%p334) target = $region60
        $region59: #{tpu_custom_call.1} parent=55 // pred_region
          %s337 = sand.u32 %s33, 1
          %s338 = scalar_lea.sflag [#allocation3], %s337
          %s339 = sand.u32 %s33, 1
          %s340 = smul.addr %s339, 128
          %s341 = scalar_lea.vmem [#allocation2], %s340
          %s342 = smul.u32 8, %s23
          %s344 = ssub.s32 2048, 2048
          %345 = vsyncadd %s338, %s344
          %s346 = smul.addr %s342, 2
          %s347 = smul.addr %s346, 128
          %s348 = scalar_lea.hbm %s0, %s347
          %s349 = sshll.u32 %s341, 4
          %s350 = int_to_ptr.vmem [resolvable:$true] %s349
          %355 = dma.hbm_to_vmem [thread:$0]  %s348, 2048, %s350, %s338, 128, 128, 8
        $region60: #{tpu_custom_call.1} parent=55 // pred_fallthru
          _
      $region56: #{tpu_custom_call.1} parent=5 // pred_fallthru
        _
      %p356 = scmp.le.s32.totalorder 1, %s23
      %p357 = scmp.lt.s32.totalorder %s23, 3
      %p358 = pnand %p356, %p357
      %p359 = pneg %p358
      // Predicated region
      $region61: #{tpu_custom_call.1} parent=5 // pred_check
        _
      $region62: #{tpu_custom_call.1} parent=5 // pred_check_branch
        %361 = sbr.rel (%p358) target = $region64
      $region63: #{tpu_custom_call.1} parent=5 // pred_region
        %s362 = ssub.s32 %s23, 1
        %s363 = sand.u32 %s36, 1
        %s364 = scalar_lea.sflag [#allocation3], %s363
        %s365 = sand.u32 %s36, 1
        %s366 = smul.addr %s365, 128
        %s367 = scalar_lea.vmem [#allocation2], %s366
        // Predicated region
        $region65: #{tpu_custom_call.1} parent=63 // pred_check
          %p368 = pneg %p49
        $region66: #{tpu_custom_call.1} parent=63 // pred_check_branch
          %370 = sbr.rel (%p368) target = $region68
        $region67: #{tpu_custom_call.1} parent=63 // pred_region
          %371 = dma.done %s364, 2048
        $region68: #{tpu_custom_call.1} parent=63 // pred_fallthru
          _
        %s372 = sand.u32 %s36, 1
        %s373 = scalar_lea.sflag [#allocation3], %s372
        %s374 = sand.u32 %s36, 1
        %s375 = smul.addr %s374, 128
        %s376 = scalar_lea.vmem [#allocation2], %s375
        %p377 = pneg %p49
        %p378 = pneg %p46
        %p379 = pneg %p70
        %p380 = pneg %p67
        %p381 = pneg %p91
        %p382 = pneg %p88
        %p383 = pneg %p112
        %p384 = pneg %p109
        %p385 = pneg %p133
        %p386 = pneg %p130
        %p387 = pneg %p154
        %p388 = pneg %p151
        %p389 = pneg %p175
        %p390 = pneg %p172
        %p391 = pneg %p196
        %p392 = pneg %p193
        %p393 = pneg %p217
        %p394 = pneg %p214
        %p395 = pneg %p238
        %p396 = pneg %p235
        %p397 = pneg %p259
        %p398 = pneg %p256
        %p399 = pneg %p285
        %p400 = pneg %p282
        %s401 = sand.u32 %s272, 1
        %s402 = scalar_lea.sflag [#allocation4], %s401
        %s403 = sand.u32 %s272, 1
        %s404 = smul.addr %s403, 8
        %s405 = scalar_lea.vmem [#allocation5], %s404
        %s406 = smul.u32 8, %s28
        %v407 = vld [vmem:[%s367] sm:$0xff]
        %v408 = vld [vmem:[%s367 + $0x8] sm:$0xff]
        %v409 = vld [vmem:[%s367 + $0x10] sm:$0xff]
        %v410 = vld [vmem:[%s367 + $0x18] sm:$0xff]
        %v411 = vld [vmem:[%s367 + $0x20] sm:$0xff]
        %v412 = vld [vmem:[%s367 + $0x28] sm:$0xff]
        %v413 = vld [vmem:[%s367 + $0x30] sm:$0xff]
        %v414 = vld [vmem:[%s367 + $0x38] sm:$0xff]
        %v415 = vld [vmem:[%s367 + $0x40] sm:$0xff]
        %v416 = vld [vmem:[%s367 + $0x48] sm:$0xff]
        %v417 = vld [vmem:[%s367 + $0x50] sm:$0xff]
        %v418 = vld [vmem:[%s367 + $0x58] sm:$0xff]
        %v419 = vld [vmem:[%s367 + $0x60] sm:$0xff]
        %v420 = vld [vmem:[%s367 + $0x68] sm:$0xff]
        %v421 = vld [vmem:[%s367 + $0x70] sm:$0xff]
        %v422 = vld [vmem:[%s367 + $0x78] sm:$0xff]
        %vm423 = vcmask 261120
        %v424 = vsel %vm423, %v407, 0.0
        %v425 = vsel %vm423, %v408, 0.0
        %v426 = vadd.f32 %v424, %v425
        %v427 = vrot.slane %v426, 4
        %v428 = vadd.f32 %v426, %v427
        %v429 = vrot.slane %v428, 2
        %v430 = vadd.f32 %v428, %v429
        %v431 = vrot.slane %v430, 1
        %v432 = vadd.f32 %v430, %v431
        %v433 = vsel %vm423, %v409, 0.0
        %v434 = vsel %vm423, %v410, 0.0
        %v435 = vadd.f32 %v433, %v434
        %v436 = vrot.slane %v435, 4
        %v437 = vadd.f32 %v435, %v436
        %v438 = vrot.slane %v437, 2
        %v439 = vadd.f32 %v437, %v438
        %v440 = vrot.slane %v439, 1
        %v441 = vadd.f32 %v439, %v440
        %v442 = vsel %vm423, %v411, 0.0
        %v443 = vsel %vm423, %v412, 0.0
        %v444 = vadd.f32 %v442, %v443
        %v445 = vrot.slane %v444, 4
        %v446 = vadd.f32 %v444, %v445
        %v447 = vrot.slane %v446, 2
        %v448 = vadd.f32 %v446, %v447
        %v449 = vrot.slane %v448, 1
        %v450 = vadd.f32 %v448, %v449
        %v451 = vsel %vm423, %v413, 0.0
        %v452 = vsel %vm423, %v414, 0.0
        %v453 = vadd.f32 %v451, %v452
        %v454 = vrot.slane %v453, 4
        %v455 = vadd.f32 %v453, %v454
        %v456 = vrot.slane %v455, 2
        %v457 = vadd.f32 %v455, %v456
        %v458 = vrot.slane %v457, 1
        %v459 = vadd.f32 %v457, %v458
        %v460 = vsel %vm423, %v415, 0.0
        %v461 = vsel %vm423, %v416, 0.0
        %v462 = vadd.f32 %v460, %v461
        %v463 = vrot.slane %v462, 4
        %v464 = vadd.f32 %v462, %v463
        %v465 = vrot.slane %v464, 2
        %v466 = vadd.f32 %v464, %v465
        %v467 = vrot.slane %v466, 1
        %v468 = vadd.f32 %v466, %v467
        %v469 = vsel %vm423, %v417, 0.0
        %v470 = vsel %vm423, %v418, 0.0
        %v471 = vadd.f32 %v469, %v470
        %v472 = vrot.slane %v471, 4
        %v473 = vadd.f32 %v471, %v472
        %v474 = vrot.slane %v473, 2
        %v475 = vadd.f32 %v473, %v474
        %v476 = vrot.slane %v475, 1
        %v477 = vadd.f32 %v475, %v476
        %v478 = vsel %vm423, %v419, 0.0
        %v479 = vsel %vm423, %v420, 0.0
        %v480 = vadd.f32 %v478, %v479
        %v481 = vrot.slane %v480, 4
        %v482 = vadd.f32 %v480, %v481
        %v483 = vrot.slane %v482, 2
        %v484 = vadd.f32 %v482, %v483
        %v485 = vrot.slane %v484, 1
        %v486 = vadd.f32 %v484, %v485
        %v487 = vsel %vm423, %v421, 0.0
        %v488 = vsel %vm423, %v422, 0.0
        %v489 = vadd.f32 %v487, %v488
        %v490 = vrot.slane %v489, 4
        %v491 = vadd.f32 %v489, %v490
        %v492 = vrot.slane %v491, 2
        %v493 = vadd.f32 %v491, %v492
        %v494 = vrot.slane %v493, 1
        %v495 = vadd.f32 %v493, %v494
        %v496 = vrcp.pop 16.0
        %v497 = vmul.f32 %v432, %v496
        %v498 = vmul.f32 %v441, %v496
        %v499 = vmul.f32 %v450, %v496
        %v500 = vmul.f32 %v459, %v496
        %v501 = vmul.f32 %v468, %v496
        %v502 = vmul.f32 %v477, %v496
        %v503 = vmul.f32 %v486, %v496
        %v504 = vmul.f32 %v495, %v496
        %v505 = vld [vmem:[%s1] sm:$0x1]
        %v507 = vlaneseq
        %v508 = vshrl.u32 %v507, 7
        %v509 = vsub.s32 0, %v508
        %v510 = vrot.slane %v505, %v509
        %v512 = vadd.f32 %v497, %v510
        %v513 = vadd.f32 %v498, %v510
        %v514 = vadd.f32 %v499, %v510
        %v515 = vadd.f32 %v500, %v510
        %v516 = vadd.f32 %v501, %v510
        %v517 = vadd.f32 %v502, %v510
        %v518 = vadd.f32 %v503, %v510
        %v519 = vadd.f32 %v504, %v510
        %v520 = vld [vmem:[%s2] sm:$0xff]
        %v521 = vld [vmem:[%s2 + $0x8] sm:$0xff]
        %v522 = vadd.f32 %v407, %v520
        %v523 = vadd.f32 %v408, %v521
        %v524 = vadd.f32 %v409, %v520
        %v525 = vadd.f32 %v410, %v521
        %v526 = vadd.f32 %v411, %v520
        %v527 = vadd.f32 %v412, %v521
        %v528 = vadd.f32 %v413, %v520
        %v529 = vadd.f32 %v414, %v521
        %v530 = vadd.f32 %v415, %v520
        %v531 = vadd.f32 %v416, %v521
        %v532 = vadd.f32 %v417, %v520
        %v533 = vadd.f32 %v418, %v521
        %v534 = vadd.f32 %v419, %v520
        %v535 = vadd.f32 %v420, %v521
        %v536 = vadd.f32 %v421, %v520
        %v537 = vadd.f32 %v422, %v521
        %v538 = vld [vmem:[%s3] sm:$0xff]
        %v539 = vld [vmem:[%s3 + $0x8] sm:$0xff]
        %v540 = vld [vmem:[%s3 + $0x10] sm:$0xff]
        %v541 = vld [vmem:[%s3 + $0x18] sm:$0xff]
        %v542 = vld [vmem:[%s4] sm:$0x1]
        %v544 = vlaneseq
        %v545 = vshrl.u32 %v544, 7
        %v546 = vsub.s32 0, %v545
        %v547 = vrot.slane %v542, %v546
        %v557 = vrot.slane %v513, 7
        %vm558 = vcmask 1041409
        %v559 = vsel %vm558, %v557, %v512
        %v560 = vrot.slane %v514, 6
        %vm561 = vcmask 1042434
        %v562 = vsel %vm561, %v560, %v559
        %v563 = vrot.slane %v515, 5
        %vm564 = vcmask 1043459
        %v565 = vsel %vm564, %v563, %v562
        %v566 = vrot.slane %v516, 4
        %vm567 = vcmask 1044484
        %v568 = vsel %vm567, %v566, %v565
        %v569 = vrot.slane %v517, 3
        %vm570 = vcmask 1045509
        %v571 = vsel %vm570, %v569, %v568
        %v572 = vrot.slane %v518, 2
        %vm573 = vcmask 1046534
        %v574 = vsel %vm573, %v572, %v571
        %v575 = vrot.slane %v519, 1
        %vm576 = vcmask 1047559
        %v577 = vsel %vm576, %v575, %v574
        %v578 = vsel %vm423, %v577, 0
        %580 = vmatprep.subr.mxu0 0.0
        %581 = vmatpush1.msra.mxu0 %v538
        %582 = vmatprep.subr.mxu0 0.0
        %583 = vmatpush1.msra.mxu0 %v539
        %584 = vmatprep.subr.mxu0 0.0
        %585 = vmatpush1.msra.mxu0 %v540
        %586 = vmatprep.subr.mxu0 0.0
        %587 = vmatpush1.msra.mxu0 %v541
        %588 = vmatprep.subr.mxu0 0.0
        %589 = vmatpush1.msra.mxu0 0.0
        %590 = vmatprep.subr.mxu0 0.0
        %591 = vmatpush1.msra.mxu0 0.0
        %592 = vmatprep.subr.mxu0 0.0
        %593 = vmatpush1.msra.mxu0 0.0
        %594 = vmatprep.subr.mxu0 0.0
        %595 = vmatpush1.msra.mxu0 0.0
        %596 = vmatprep.subr.mxu0 0.0
        %597 = vmatpush1.msra.mxu0 0.0
        %598 = vmatprep.subr.mxu0 0.0
        %599 = vmatpush1.msra.mxu0 0.0
        %600 = vmatprep.subr.mxu0 0.0
        %601 = vmatpush1.msra.mxu0 0.0
        %602 = vmatprep.subr.mxu0 0.0
        %603 = vmatpush1.msra.mxu0 0.0
        %604 = vmatprep.subr.mxu0 0.0
        %605 = vmatpush1.msra.mxu0 0.0
        %606 = vmatprep.subr.mxu0 0.0
        %607 = vmatpush1.msra.mxu0 0.0
        %608 = vmatprep.subr.mxu0 0.0
        %609 = vmatpush1.msra.mxu0 0.0
        %610 = vmatprep.subr.mxu0 0.0
        %611 = vmatpush1.msra.mxu0 0.0
        %612 = vmatprep.subr.mxu0 0.0
        %613 = vmatpush1.msra.mxu0 0.0
        %614 = vmatprep.subr.mxu0 0.0
        %615 = vmatpush1.msra.mxu0 0.0
        %616 = vmatprep.subr.mxu0 0.0
        %617 = vmatpush1.msra.mxu0 0.0
        %618 = vmatprep.subr.mxu0 0.0
        %619 = vmatpush1.msra.mxu0 0.0
        %620 = vmatprep.subr.mxu0 0.0
        %621 = vmatpush1.msra.mxu0 0.0
        %622 = vmatprep.subr.mxu0 0.0
        %623 = vmatpush1.msra.mxu0 0.0
        %624 = vmatprep.subr.mxu0 0.0
        %625 = vmatpush1.msra.mxu0 0.0
        %626 = vmatprep.subr.mxu0 0.0
        %627 = vmatpush1.msra.mxu0 0.0
        %628 = vmatprep.subr.mxu0 0.0
        %629 = vmatpush1.msra.mxu0 0.0
        %630 = vmatprep.subr.mxu0 0.0
        %631 = vmatpush1.msra.mxu0 0.0
        %632 = vmatprep.subr.mxu0 0.0
        %633 = vmatpush1.msra.mxu0 0.0
        %634 = vmatprep.subr.mxu0 0.0
        %635 = vmatpush1.msra.mxu0 0.0
        %636 = vmatprep.subr.mxu0 0.0
        %637 = vmatpush1.msra.mxu0 0.0
        %638 = vmatprep.subr.mxu0 0.0
        %639 = vmatpush1.msra.mxu0 0.0
        %640 = vmatprep.subr.mxu0 0.0
        %641 = vmatpush1.msra.mxu0 0.0
        %642 = vmatprep.subr.mxu0 0.0
        %643 = vmatpush1.msra.mxu0 0.0
        %644 = vmatprep.mubr.f32.mxu0 0.0
        %645 = vmatmul.mubr.f32.gmra.mrb[0].mxu0 %v578
        %v646 = vpop.f32.mrb[0].mxu0
        %v647 = vadd.f32 %v547, %v646
        %v648 = vpop.f32.mrb[0].mxu0
        %649 = vdwg.mxu0
        %v650 = vmul.f32 %v647, 0.35355338
        %v651 = vld [vmem:[%s5] sm:$0xff]
        %v652 = vld [vmem:[%s5 + $0x8] sm:$0xff]
        %v653 = vld [vmem:[%s5 + $0x10] sm:$0xff]
        %v654 = vld [vmem:[%s5 + $0x18] sm:$0xff]
        %v655 = vld [vmem:[%s6] sm:$0x1]
        %v657 = vlaneseq
        %v658 = vshrl.u32 %v657, 7
        %v659 = vsub.s32 0, %v658
        %v660 = vrot.slane %v655, %v659
        %v663 = vsel %vm423, %v522, 0
        %v666 = vsel %vm423, %v523, 0
        %v669 = vsel %vm423, %v524, 0
        %v672 = vsel %vm423, %v525, 0
        %v675 = vsel %vm423, %v526, 0
        %v678 = vsel %vm423, %v527, 0
        %v681 = vsel %vm423, %v528, 0
        %v684 = vsel %vm423, %v529, 0
        %v687 = vsel %vm423, %v530, 0
        %v690 = vsel %vm423, %v531, 0
        %v693 = vsel %vm423, %v532, 0
        %v696 = vsel %vm423, %v533, 0
        %v699 = vsel %vm423, %v534, 0
        %v702 = vsel %vm423, %v535, 0
        %v705 = vsel %vm423, %v536, 0
        %v708 = vsel %vm423, %v537, 0
        %710 = vmatprep.subr.mxu0 0.0
        %711 = vmatpush1.msra.mxu0 %v651
        %712 = vmatprep.subr.mxu0 0.0
        %713 = vmatpush1.msra.mxu0 %v652
        %714 = vmatprep.subr.mxu0 0.0
        %715 = vmatpush1.msra.mxu0 %v653
        %716 = vmatprep.subr.mxu0 0.0
        %717 = vmatpush1.msra.mxu0 %v654
        %718 = vmatprep.subr.mxu0 0.0
        %719 = vmatpush1.msra.mxu0 0.0
        %720 = vmatprep.subr.mxu0 0.0
        %721 = vmatpush1.msra.mxu0 0.0
        %722 = vmatprep.subr.mxu0 0.0
        %723 = vmatpush1.msra.mxu0 0.0
        %724 = vmatprep.subr.mxu0 0.0
        %725 = vmatpush1.msra.mxu0 0.0
        %726 = vmatprep.subr.mxu0 0.0
        %727 = vmatpush1.msra.mxu0 0.0
        %728 = vmatprep.subr.mxu0 0.0
        %729 = vmatpush1.msra.mxu0 0.0
        %730 = vmatprep.subr.mxu0 0.0
        %731 = vmatpush1.msra.mxu0 0.0
        %732 = vmatprep.subr.mxu0 0.0
        %733 = vmatpush1.msra.mxu0 0.0
        %734 = vmatprep.subr.mxu0 0.0
        %735 = vmatpush1.msra.mxu0 0.0
        %736 = vmatprep.subr.mxu0 0.0
        %737 = vmatpush1.msra.mxu0 0.0
        %738 = vmatprep.subr.mxu0 0.0
        %739 = vmatpush1.msra.mxu0 0.0
        %740 = vmatprep.subr.mxu0 0.0
        %741 = vmatpush1.msra.mxu0 0.0
        %742 = vmatprep.subr.mxu0 0.0
        %743 = vmatpush1.msra.mxu0 0.0
        %744 = vmatprep.subr.mxu0 0.0
        %745 = vmatpush1.msra.mxu0 0.0
        %746 = vmatprep.subr.mxu0 0.0
        %747 = vmatpush1.msra.mxu0 0.0
        %748 = vmatprep.subr.mxu0 0.0
        %749 = vmatpush1.msra.mxu0 0.0
        %750 = vmatprep.subr.mxu0 0.0
        %751 = vmatpush1.msra.mxu0 0.0
        %752 = vmatprep.subr.mxu0 0.0
        %753 = vmatpush1.msra.mxu0 0.0
        %754 = vmatprep.subr.mxu0 0.0
        %755 = vmatpush1.msra.mxu0 0.0
        %756 = vmatprep.subr.mxu0 0.0
        %757 = vmatpush1.msra.mxu0 0.0
        %758 = vmatprep.subr.mxu0 0.0
        %759 = vmatpush1.msra.mxu0 0.0
        %760 = vmatprep.subr.mxu0 0.0
        %761 = vmatpush1.msra.mxu0 0.0
        %762 = vmatprep.subr.mxu0 0.0
        %763 = vmatpush1.msra.mxu0 0.0
        %764 = vmatprep.subr.mxu0 0.0
        %765 = vmatpush1.msra.mxu0 0.0
        %766 = vmatprep.subr.mxu0 0.0
        %767 = vmatpush1.msra.mxu0 0.0
        %768 = vmatprep.subr.mxu0 0.0
        %769 = vmatpush1.msra.mxu0 0.0
        %770 = vmatprep.subr.mxu0 0.0
        %771 = vmatpush1.msra.mxu0 0.0
        %772 = vmatprep.subr.mxu0 0.0
        %773 = vmatpush1.msra.mxu0 0.0
        %774 = vmatprep.mubr.f32.mxu0 0.0
        %775 = vmatmul.mubr.f32.gmra.mrb[0].mxu0 %v663
        %v776 = vpop.f32.mrb[0].mxu0
        %v777 = vadd.f32 %v660, %v776
        %v778 = vpop.f32.mrb[0].mxu0
        %779 = vmatprep.mubr.f32.mxu0 0.0
        %780 = vmatmul.mubr.f32.gmra.mrb[0].mxu0 %v666
        %v781 = vpop.f32.mrb[0].mxu0
        %v782 = vadd.f32 %v660, %v781
        %v783 = vpop.f32.mrb[0].mxu0
        %784 = vmatprep.mubr.f32.mxu0 0.0
        %785 = vmatmul.mubr.f32.gmra.mrb[0].mxu0 %v669
        %v786 = vpop.f32.mrb[0].mxu0
        %v787 = vadd.f32 %v660, %v786
        %v788 = vpop.f32.mrb[0].mxu0
        %789 = vmatprep.mubr.f32.mxu0 0.0
        %790 = vmatmul.mubr.f32.gmra.mrb[0].mxu0 %v672
        %v791 = vpop.f32.mrb[0].mxu0
        %v792 = vadd.f32 %v660, %v791
        %v793 = vpop.f32.mrb[0].mxu0
        %794 = vmatprep.mubr.f32.mxu0 0.0
        %795 = vmatmul.mubr.f32.gmra.mrb[0].mxu0 %v675
        %v796 = vpop.f32.mrb[0].mxu0
        %v797 = vadd.f32 %v660, %v796
        %v798 = vpop.f32.mrb[0].mxu0
        %799 = vmatprep.mubr.f32.mxu0 0.0
        %800 = vmatmul.mubr.f32.gmra.mrb[0].mxu0 %v678
        %v801 = vpop.f32.mrb[0].mxu0
        %v802 = vadd.f32 %v660, %v801
        %v803 = vpop.f32.mrb[0].mxu0
        %804 = vmatprep.mubr.f32.mxu0 0.0
        %805 = vmatmul.mubr.f32.gmra.mrb[0].mxu0 %v681
        %v806 = vpop.f32.mrb[0].mxu0
        %v807 = vadd.f32 %v660, %v806
        %v808 = vpop.f32.mrb[0].mxu0
        %809 = vmatprep.mubr.f32.mxu0 0.0
        %810 = vmatmul.mubr.f32.gmra.mrb[0].mxu0 %v684
        %v811 = vpop.f32.mrb[0].mxu0
        %v812 = vadd.f32 %v660, %v811
        %v813 = vpop.f32.mrb[0].mxu0
        %814 = vmatprep.mubr.f32.mxu0 0.0
        %815 = vmatmul.mubr.f32.gmra.mrb[0].mxu0 %v687
        %v816 = vpop.f32.mrb[0].mxu0
        %v817 = vadd.f32 %v660, %v816
        %v818 = vpop.f32.mrb[0].mxu0
        %819 = vmatprep.mubr.f32.mxu0 0.0
        %820 = vmatmul.mubr.f32.gmra.mrb[0].mxu0 %v690
        %v821 = vpop.f32.mrb[0].mxu0
        %v822 = vadd.f32 %v660, %v821
        %v823 = vpop.f32.mrb[0].mxu0
        %824 = vmatprep.mubr.f32.mxu0 0.0
        %825 = vmatmul.mubr.f32.gmra.mrb[0].mxu0 %v693
        %v826 = vpop.f32.mrb[0].mxu0
        %v827 = vadd.f32 %v660, %v826
        %v828 = vpop.f32.mrb[0].mxu0
        %829 = vmatprep.mubr.f32.mxu0 0.0
        %830 = vmatmul.mubr.f32.gmra.mrb[0].mxu0 %v696
        %v831 = vpop.f32.mrb[0].mxu0
        %v832 = vadd.f32 %v660, %v831
        %v833 = vpop.f32.mrb[0].mxu0
        %834 = vmatprep.mubr.f32.mxu0 0.0
        %835 = vmatmul.mubr.f32.gmra.mrb[0].mxu0 %v699
        %v836 = vpop.f32.mrb[0].mxu0
        %v837 = vadd.f32 %v660, %v836
        %v838 = vpop.f32.mrb[0].mxu0
        %839 = vmatprep.mubr.f32.mxu0 0.0
        %840 = vmatmul.mubr.f32.gmra.mrb[0].mxu0 %v702
        %v841 = vpop.f32.mrb[0].mxu0
        %v842 = vadd.f32 %v660, %v841
        %v843 = vpop.f32.mrb[0].mxu0
        %844 = vmatprep.mubr.f32.mxu0 0.0
        %845 = vmatmul.mubr.f32.gmra.mrb[0].mxu0 %v705
        %v846 = vpop.f32.mrb[0].mxu0
        %v847 = vadd.f32 %v660, %v846
        %v848 = vpop.f32.mrb[0].mxu0
        %849 = vmatprep.mubr.f32.mxu0 0.0
        %850 = vmatmul.mubr.f32.gmra.mrb[0].mxu0 %v708
        %v851 = vpop.f32.mrb[0].mxu0
        %v852 = vadd.f32 %v660, %v851
        %v853 = vpop.f32.mrb[0].mxu0
        %854 = vdwg.mxu0
        %v855 = vld [vmem:[%s9] sm:$0xff]
        %v856 = vld [vmem:[%s9 + $0x8] sm:$0xff]
        %v857 = vld [vmem:[%s9 + $0x10] sm:$0xff]
        %v858 = vld [vmem:[%s9 + $0x18] sm:$0xff]
        %v859 = vld [vmem:[%s10] sm:$0xf]
        %v861 = vcombine.high %v650, %v650
        %v863 = vunpack.c.l.s4 1966171168
        %v864 = vunpack.c.0.s8 %v863
        %v865 = vlaneseq
        %v866 = vshrl.u32 %v865, 7
        %v867 = vsub.s32 %v864, %v866
        %v868 = vrot.slane %v650, %v867
        %v870 = vunpack.c.l.s4 1966171168
        %v871 = vunpack.c.0.s8 %v870
        %v872 = vlaneseq
        %v873 = vshrl.u32 %v872, 7
        %v874 = vsub.s32 %v871, %v873
        %v875 = vrot.slane %v861, %v874
        %v876 = vcombine.high %v868, %v868
        %v877 = vcombine.high %v875, %v875
        %v879 = vunpack.c.l.s4 1966171168
        %v880 = vunpack.c.0.s8 %v879
        %v881 = vlaneseq
        %v882 = vshrl.u32 %v881, 7
        %v883 = vsub.s32 %v880, %v882
        %v884 = vrot.slane %v868, %v883
        %v886 = vunpack.c.l.s4 1966171168
        %v887 = vunpack.c.0.s8 %v886
        %v888 = vlaneseq
        %v889 = vshrl.u32 %v888, 7
        %v890 = vsub.s32 %v887, %v889
        %v891 = vrot.slane %v875, %v890
        %v893 = vunpack.c.l.s4 1966171168
        %v894 = vunpack.c.0.s8 %v893
        %v895 = vlaneseq
        %v896 = vshrl.u32 %v895, 7
        %v897 = vsub.s32 %v894, %v896
        %v898 = vrot.slane %v876, %v897
        %v900 = vunpack.c.l.s4 1966171168
        %v901 = vunpack.c.0.s8 %v900
        %v902 = vlaneseq
        %v903 = vshrl.u32 %v902, 7
        %v904 = vsub.s32 %v901, %v903
        %v905 = vrot.slane %v877, %v904
        %v906 = vcombine.high %v884, %v884
        %v907 = vcombine.high %v891, %v891
        %v908 = vcombine.high %v898, %v898
        %v909 = vcombine.high %v905, %v905
        %v910 = vlaneseq
        %v911 = vshrl.u32 %v910, 7
        %v912 = vsub.s32 0, %v911
        %v913 = vrot.slane %v884, %v912
        %v914 = vlaneseq
        %v915 = vshrl.u32 %v914, 7
        %v916 = vsub.s32 0, %v915
        %v917 = vrot.slane %v898, %v916
        %v918 = vlaneseq
        %v919 = vshrl.u32 %v918, 7
        %v920 = vsub.s32 0, %v919
        %v921 = vrot.slane %v906, %v920
        %v922 = vlaneseq
        %v923 = vshrl.u32 %v922, 7
        %v924 = vsub.s32 0, %v923
        %v925 = vrot.slane %v908, %v924
        %v926 = vlaneseq
        %v927 = vshrl.u32 %v926, 7
        %v928 = vsub.s32 0, %v927
        %v929 = vrot.slane %v891, %v928
        %v930 = vlaneseq
        %v931 = vshrl.u32 %v930, 7
        %v932 = vsub.s32 0, %v931
        %v933 = vrot.slane %v905, %v932
        %v934 = vlaneseq
        %v935 = vshrl.u32 %v934, 7
        %v936 = vsub.s32 0, %v935
        %v937 = vrot.slane %v907, %v936
        %v938 = vlaneseq
        %v939 = vshrl.u32 %v938, 7
        %v940 = vsub.s32 0, %v939
        %v941 = vrot.slane %v909, %v940
        %v950 = vmul.f32 %v777, %v913
        %v951 = vmul.f32 %v782, %v913
        %v952 = vmul.f32 %v787, %v917
        %v953 = vmul.f32 %v792, %v917
        %v954 = vmul.f32 %v797, %v921
        %v955 = vmul.f32 %v802, %v921
        %v956 = vmul.f32 %v807, %v925
        %v957 = vmul.f32 %v812, %v925
        %v958 = vmul.f32 %v817, %v929
        %v959 = vmul.f32 %v822, %v929
        %v960 = vmul.f32 %v827, %v933
        %v961 = vmul.f32 %v832, %v933
        %v962 = vmul.f32 %v837, %v937
        %v963 = vmul.f32 %v842, %v937
        %v964 = vmul.f32 %v847, %v941
        %v965 = vmul.f32 %v852, %v941
        %v967 = vsel %vm423, %v950, 0
        %v970 = vsel %vm423, %v951, 0
        %v973 = vsel %vm423, %v952, 0
        %v976 = vsel %vm423, %v953, 0
        %v979 = vsel %vm423, %v954, 0
        %v982 = vsel %vm423, %v955, 0
        %v985 = vsel %vm423, %v956, 0
        %v988 = vsel %vm423, %v957, 0
        %v991 = vsel %vm423, %v958, 0
        %v994 = vsel %vm423, %v959, 0
        %v997 = vsel %vm423, %v960, 0
        %v1000 = vsel %vm423, %v961, 0
        %v1003 = vsel %vm423, %v962, 0
        %v1006 = vsel %vm423, %v963, 0
        %v1009 = vsel %vm423, %v964, 0
        %v1012 = vsel %vm423, %v965, 0
        %1014 = vmatprep.subr.mxu0 0.0
        %1015 = vmatpush1.msra.mxu0 %v855
        %1016 = vmatprep.subr.mxu0 0.0
        %1017 = vmatpush1.msra.mxu0 %v856
        %1018 = vmatprep.subr.mxu0 0.0
        %1019 = vmatpush1.msra.mxu0 %v857
        %1020 = vmatprep.subr.mxu0 0.0
        %1021 = vmatpush1.msra.mxu0 %v858
        %1022 = vmatprep.subr.mxu0 0.0
        %1023 = vmatpush1.msra.mxu0 0.0
        %1024 = vmatprep.subr.mxu0 0.0
        %1025 = vmatpush1.msra.mxu0 0.0
        %1026 = vmatprep.subr.mxu0 0.0
        %1027 = vmatpush1.msra.mxu0 0.0
        %1028 = vmatprep.subr.mxu0 0.0
        %1029 = vmatpush1.msra.mxu0 0.0
        %1030 = vmatprep.subr.mxu0 0.0
        %1031 = vmatpush1.msra.mxu0 0.0
        %1032 = vmatprep.subr.mxu0 0.0
        %1033 = vmatpush1.msra.mxu0 0.0
        %1034 = vmatprep.subr.mxu0 0.0
        %1035 = vmatpush1.msra.mxu0 0.0
        %1036 = vmatprep.subr.mxu0 0.0
        %1037 = vmatpush1.msra.mxu0 0.0
        %1038 = vmatprep.subr.mxu0 0.0
        %1039 = vmatpush1.msra.mxu0 0.0
        %1040 = vmatprep.subr.mxu0 0.0
        %1041 = vmatpush1.msra.mxu0 0.0
        %1042 = vmatprep.subr.mxu0 0.0
        %1043 = vmatpush1.msra.mxu0 0.0
        %1044 = vmatprep.subr.mxu0 0.0
        %1045 = vmatpush1.msra.mxu0 0.0
        %1046 = vmatprep.subr.mxu0 0.0
        %1047 = vmatpush1.msra.mxu0 0.0
        %1048 = vmatprep.subr.mxu0 0.0
        %1049 = vmatpush1.msra.mxu0 0.0
        %1050 = vmatprep.subr.mxu0 0.0
        %1051 = vmatpush1.msra.mxu0 0.0
        %1052 = vmatprep.subr.mxu0 0.0
        %1053 = vmatpush1.msra.mxu0 0.0
        %1054 = vmatprep.subr.mxu0 0.0
        %1055 = vmatpush1.msra.mxu0 0.0
        %1056 = vmatprep.subr.mxu0 0.0
        %1057 = vmatpush1.msra.mxu0 0.0
        %1058 = vmatprep.subr.mxu0 0.0
        %1059 = vmatpush1.msra.mxu0 0.0
        %1060 = vmatprep.subr.mxu0 0.0
        %1061 = vmatpush1.msra.mxu0 0.0
        %1062 = vmatprep.subr.mxu0 0.0
        %1063 = vmatpush1.msra.mxu0 0.0
        %1064 = vmatprep.subr.mxu0 0.0
        %1065 = vmatpush1.msra.mxu0 0.0
        %1066 = vmatprep.subr.mxu0 0.0
        %1067 = vmatpush1.msra.mxu0 0.0
        %1068 = vmatprep.subr.mxu0 0.0
        %1069 = vmatpush1.msra.mxu0 0.0
        %1070 = vmatprep.subr.mxu0 0.0
        %1071 = vmatpush1.msra.mxu0 0.0
        %1072 = vmatprep.subr.mxu0 0.0
        %1073 = vmatpush1.msra.mxu0 0.0
        %1074 = vmatprep.subr.mxu0 0.0
        %1075 = vmatpush1.msra.mxu0 0.0
        %1076 = vmatprep.subr.mxu0 0.0
        %1077 = vmatpush1.msra.mxu0 0.0
        %1078 = vmatprep.mubr.f32.mxu0 0.0
        %1079 = vmatmul.mubr.f32.gmra.mrb[0].mxu0 %v967
        %v1080 = vpop.f32.mrb[0].mxu0
        %v1081 = vadd.f32 0.0, %v1080
        %v1082 = vpop.f32.mrb[0].mxu0
        %1083 = vmatprep.mubr.f32.mxu0 0.0
        %1084 = vmatmul.mubr.f32.gmra.mrb[0].mxu0 %v970
        %v1085 = vpop.f32.mrb[0].mxu0
        %v1086 = vadd.f32 0.0, %v1085
        %v1087 = vpop.f32.mrb[0].mxu0
        %1088 = vmatprep.mubr.f32.mxu0 0.0
        %1089 = vmatmul.mubr.f32.gmra.mrb[0].mxu0 %v973
        %v1090 = vpop.f32.mrb[0].mxu0
        %v1091 = vadd.f32 0.0, %v1090
        %v1092 = vpop.f32.mrb[0].mxu0
        %1093 = vmatprep.mubr.f32.mxu0 0.0
        %1094 = vmatmul.mubr.f32.gmra.mrb[0].mxu0 %v976
        %v1095 = vpop.f32.mrb[0].mxu0
        %v1096 = vadd.f32 0.0, %v1095
        %v1097 = vpop.f32.mrb[0].mxu0
        %1098 = vmatprep.mubr.f32.mxu0 0.0
        %1099 = vmatmul.mubr.f32.gmra.mrb[0].mxu0 %v979
        %v1100 = vpop.f32.mrb[0].mxu0
        %v1101 = vadd.f32 0.0, %v1100
        %v1102 = vpop.f32.mrb[0].mxu0
        %1103 = vmatprep.mubr.f32.mxu0 0.0
        %1104 = vmatmul.mubr.f32.gmra.mrb[0].mxu0 %v982
        %v1105 = vpop.f32.mrb[0].mxu0
        %v1106 = vadd.f32 0.0, %v1105
        %v1107 = vpop.f32.mrb[0].mxu0
        %1108 = vmatprep.mubr.f32.mxu0 0.0
        %1109 = vmatmul.mubr.f32.gmra.mrb[0].mxu0 %v985
        %v1110 = vpop.f32.mrb[0].mxu0
        %v1111 = vadd.f32 0.0, %v1110
        %v1112 = vpop.f32.mrb[0].mxu0
        %1113 = vmatprep.mubr.f32.mxu0 0.0
        %1114 = vmatmul.mubr.f32.gmra.mrb[0].mxu0 %v988
        %v1115 = vpop.f32.mrb[0].mxu0
        %v1116 = vadd.f32 0.0, %v1115
        %v1117 = vpop.f32.mrb[0].mxu0
        %1118 = vmatprep.mubr.f32.mxu0 0.0
        %1119 = vmatmul.mubr.f32.gmra.mrb[0].mxu0 %v991
        %v1120 = vpop.f32.mrb[0].mxu0
        %v1121 = vadd.f32 0.0, %v1120
        %v1122 = vpop.f32.mrb[0].mxu0
        %1123 = vmatprep.mubr.f32.mxu0 0.0
        %1124 = vmatmul.mubr.f32.gmra.mrb[0].mxu0 %v994
        %v1125 = vpop.f32.mrb[0].mxu0
        %v1126 = vadd.f32 0.0, %v1125
        %v1127 = vpop.f32.mrb[0].mxu0
        %1128 = vmatprep.mubr.f32.mxu0 0.0
        %1129 = vmatmul.mubr.f32.gmra.mrb[0].mxu0 %v997
        %v1130 = vpop.f32.mrb[0].mxu0
        %v1131 = vadd.f32 0.0, %v1130
        %v1132 = vpop.f32.mrb[0].mxu0
        %1133 = vmatprep.mubr.f32.mxu0 0.0
        %1134 = vmatmul.mubr.f32.gmra.mrb[0].mxu0 %v1000
        %v1135 = vpop.f32.mrb[0].mxu0
        %v1136 = vadd.f32 0.0, %v1135
        %v1137 = vpop.f32.mrb[0].mxu0
        %1138 = vmatprep.mubr.f32.mxu0 0.0
        %1139 = vmatmul.mubr.f32.gmra.mrb[0].mxu0 %v1003
        %v1140 = vpop.f32.mrb[0].mxu0
        %v1141 = vadd.f32 0.0, %v1140
        %v1142 = vpop.f32.mrb[0].mxu0
        %1143 = vmatprep.mubr.f32.mxu0 0.0
        %1144 = vmatmul.mubr.f32.gmra.mrb[0].mxu0 %v1006
        %v1145 = vpop.f32.mrb[0].mxu0
        %v1146 = vadd.f32 0.0, %v1145
        %v1147 = vpop.f32.mrb[0].mxu0
        %1148 = vmatprep.mubr.f32.mxu0 0.0
        %1149 = vmatmul.mubr.f32.gmra.mrb[0].mxu0 %v1009
        %v1150 = vpop.f32.mrb[0].mxu0
        %v1151 = vadd.f32 0.0, %v1150
        %v1152 = vpop.f32.mrb[0].mxu0
        %1153 = vmatprep.mubr.f32.mxu0 0.0
        %1154 = vmatmul.mubr.f32.gmra.mrb[0].mxu0 %v1012
        %v1155 = vpop.f32.mrb[0].mxu0
        %v1156 = vadd.f32 0.0, %v1155
        %v1157 = vpop.f32.mrb[0].mxu0
        %1158 = vdwg.mxu0
        %1159 = vrot.lane.b32.xlu0 %v650, 32
        %v1160 = vpop.permute.xlu0 %1159
        %v1162 = vmul.f32 %v647, %v1160
        %1164 = vrot.lane.b32.xlu0 %v1162, 96
        %v1165 = vpop.permute.xlu0 %1164
        %v1166 = vsel %vm423, %v1165, 0
        %1168 = vmatprep.subr.mxu0 0.0
        %1169 = vmatpush1.msra.mxu0 %v855
        %1170 = vmatprep.subr.mxu0 0.0
        %1171 = vmatpush1.msra.mxu0 %v856
        %1172 = vmatprep.subr.mxu0 0.0
        %1173 = vmatpush1.msra.mxu0 %v857
        %1174 = vmatprep.subr.mxu0 0.0
        %1175 = vmatpush1.msra.mxu0 %v858
        %1176 = vmatprep.subr.mxu0 0.0
        %1177 = vmatpush1.msra.mxu0 0.0
        %1178 = vmatprep.subr.mxu0 0.0
        %1179 = vmatpush1.msra.mxu0 0.0
        %1180 = vmatprep.subr.mxu0 0.0
        %1181 = vmatpush1.msra.mxu0 0.0
        %1182 = vmatprep.subr.mxu0 0.0
        %1183 = vmatpush1.msra.mxu0 0.0
        %1184 = vmatprep.subr.mxu0 0.0
        %1185 = vmatpush1.msra.mxu0 0.0
        %1186 = vmatprep.subr.mxu0 0.0
        %1187 = vmatpush1.msra.mxu0 0.0
        %1188 = vmatprep.subr.mxu0 0.0
        %1189 = vmatpush1.msra.mxu0 0.0
        %1190 = vmatprep.subr.mxu0 0.0
        %1191 = vmatpush1.msra.mxu0 0.0
        %1192 = vmatprep.subr.mxu0 0.0
        %1193 = vmatpush1.msra.mxu0 0.0
        %1194 = vmatprep.subr.mxu0 0.0
        %1195 = vmatpush1.msra.mxu0 0.0
        %1196 = vmatprep.subr.mxu0 0.0
        %1197 = vmatpush1.msra.mxu0 0.0
        %1198 = vmatprep.subr.mxu0 0.0
        %1199 = vmatpush1.msra.mxu0 0.0
        %1200 = vmatprep.subr.mxu0 0.0
        %1201 = vmatpush1.msra.mxu0 0.0
        %1202 = vmatprep.subr.mxu0 0.0
        %1203 = vmatpush1.msra.mxu0 0.0
        %1204 = vmatprep.subr.mxu0 0.0
        %1205 = vmatpush1.msra.mxu0 0.0
        %1206 = vmatprep.subr.mxu0 0.0
        %1207 = vmatpush1.msra.mxu0 0.0
        %1208 = vmatprep.subr.mxu0 0.0
        %1209 = vmatpush1.msra.mxu0 0.0
        %1210 = vmatprep.subr.mxu0 0.0
        %1211 = vmatpush1.msra.mxu0 0.0
        %1212 = vmatprep.subr.mxu0 0.0
        %1213 = vmatpush1.msra.mxu0 0.0
        %1214 = vmatprep.subr.mxu0 0.0
        %1215 = vmatpush1.msra.mxu0 0.0
        %1216 = vmatprep.subr.mxu0 0.0
        %1217 = vmatpush1.msra.mxu0 0.0
        %1218 = vmatprep.subr.mxu0 0.0
        %1219 = vmatpush1.msra.mxu0 0.0
        %1220 = vmatprep.subr.mxu0 0.0
        %1221 = vmatpush1.msra.mxu0 0.0
        %1222 = vmatprep.subr.mxu0 0.0
        %1223 = vmatpush1.msra.mxu0 0.0
        %1224 = vmatprep.subr.mxu0 0.0
        %1225 = vmatpush1.msra.mxu0 0.0
        %1226 = vmatprep.subr.mxu0 0.0
        %1227 = vmatpush1.msra.mxu0 0.0
        %1228 = vmatprep.subr.mxu0 0.0
        %1229 = vmatpush1.msra.mxu0 0.0
        %1230 = vmatprep.subr.mxu0 0.0
        %1231 = vmatpush1.msra.mxu0 0.0
        %1232 = vmatprep.mubr.f32.mxu0 0.0
        %1233 = vmatmul.mubr.f32.gmra.mrb[0].mxu0 %v1166
        %v1234 = vpop.f32.mrb[0].mxu0
        %v1235 = vadd.f32 0.0, %v1234
        %v1236 = vpop.f32.mrb[0].mxu0
        %1237 = vdwg.mxu0
        %vm1238 = vcmask 31744
        %v1239 = vsel %vm1238, %v1081, -inf
        %v1240 = vsel %vm1238, %v1086, -inf
        %v1241 = vmax.f32 %v1239, %v1240
        %v1242 = vrot.slane %v1241, 4
        %v1243 = vmax.f32 %v1241, %v1242
        %v1244 = vrot.slane %v1243, 2
        %v1245 = vmax.f32 %v1243, %v1244
        %v1246 = vrot.slane %v1245, 1
        %v1247 = vmax.f32 %v1245, %v1246
        %v1248 = vsel %vm1238, %v1091, -inf
        %v1249 = vsel %vm1238, %v1096, -inf
        %v1250 = vmax.f32 %v1248, %v1249
        %v1251 = vrot.slane %v1250, 4
        %v1252 = vmax.f32 %v1250, %v1251
        %v1253 = vrot.slane %v1252, 2
        %v1254 = vmax.f32 %v1252, %v1253
        %v1255 = vrot.slane %v1254, 1
        %v1256 = vmax.f32 %v1254, %v1255
        %v1257 = vsel %vm1238, %v1101, -inf
        %v1258 = vsel %vm1238, %v1106, -inf
        %v1259 = vmax.f32 %v1257, %v1258
        %v1260 = vrot.slane %v1259, 4
        %v1261 = vmax.f32 %v1259, %v1260
        %v1262 = vrot.slane %v1261, 2
        %v1263 = vmax.f32 %v1261, %v1262
        %v1264 = vrot.slane %v1263, 1
        %v1265 = vmax.f32 %v1263, %v1264
        %v1266 = vsel %vm1238, %v1111, -inf
        %v1267 = vsel %vm1238, %v1116, -inf
        %v1268 = vmax.f32 %v1266, %v1267
        %v1269 = vrot.slane %v1268, 4
        %v1270 = vmax.f32 %v1268, %v1269
        %v1271 = vrot.slane %v1270, 2
        %v1272 = vmax.f32 %v1270, %v1271
        %v1273 = vrot.slane %v1272, 1
        %v1274 = vmax.f32 %v1272, %v1273
        %v1275 = vsel %vm1238, %v1121, -inf
        %v1276 = vsel %vm1238, %v1126, -inf
        %v1277 = vmax.f32 %v1275, %v1276
        %v1278 = vrot.slane %v1277, 4
        %v1279 = vmax.f32 %v1277, %v1278
        %v1280 = vrot.slane %v1279, 2
        %v1281 = vmax.f32 %v1279, %v1280
        %v1282 = vrot.slane %v1281, 1
        %v1283 = vmax.f32 %v1281, %v1282
        %v1284 = vsel %vm1238, %v1131, -inf
        %v1285 = vsel %vm1238, %v1136, -inf
        %v1286 = vmax.f32 %v1284, %v1285
        %v1287 = vrot.slane %v1286, 4
        %v1288 = vmax.f32 %v1286, %v1287
        %v1289 = vrot.slane %v1288, 2
        %v1290 = vmax.f32 %v1288, %v1289
        %v1291 = vrot.slane %v1290, 1
        %v1292 = vmax.f32 %v1290, %v1291
        %v1293 = vsel %vm1238, %v1141, -inf
        %v1294 = vsel %vm1238, %v1146, -inf
        %v1295 = vmax.f32 %v1293, %v1294
        %v1296 = vrot.slane %v1295, 4
        %v1297 = vmax.f32 %v1295, %v1296
        %v1298 = vrot.slane %v1297, 2
        %v1299 = vmax.f32 %v1297, %v1298
        %v1300 = vrot.slane %v1299, 1
        %v1301 = vmax.f32 %v1299, %v1300
        %v1302 = vsel %vm1238, %v1151, -inf
        %v1303 = vsel %vm1238, %v1156, -inf
        %v1304 = vmax.f32 %v1302, %v1303
        %v1305 = vrot.slane %v1304, 4
        %v1306 = vmax.f32 %v1304, %v1305
        %v1307 = vrot.slane %v1306, 2
        %v1308 = vmax.f32 %v1306, %v1307
        %v1309 = vrot.slane %v1308, 1
        %v1310 = vmax.f32 %v1308, %v1309
        %v1312 = vrot.slane %v1235, 1
        %v1313 = vrot.slane %v1235, 2
        %v1314 = vrot.slane %v1235, 3
        %v1315 = vrot.slane %v1235, 4
        %v1316 = vrot.slane %v1235, 5
        %v1317 = vrot.slane %v1235, 6
        %v1318 = vrot.slane %v1235, 7
        %v1327 = vmax.f32 %v1247, %v1235
        %v1328 = vmax.f32 %v1256, %v1312
        %v1329 = vmax.f32 %v1265, %v1313
        %v1330 = vmax.f32 %v1274, %v1314
        %v1331 = vmax.f32 %v1283, %v1315
        %v1332 = vmax.f32 %v1292, %v1316
        %v1333 = vmax.f32 %v1301, %v1317
        %v1334 = vmax.f32 %v1310, %v1318
        %v1343 = vrot.slane %v1328, 7
        %v1344 = vsel %vm558, %v1343, %v1327
        %v1345 = vrot.slane %v1329, 6
        %v1346 = vsel %vm561, %v1345, %v1344
        %v1347 = vrot.slane %v1330, 5
        %v1348 = vsel %vm564, %v1347, %v1346
        %v1349 = vrot.slane %v1331, 4
        %v1350 = vsel %vm567, %v1349, %v1348
        %v1351 = vrot.slane %v1332, 3
        %v1352 = vsel %vm570, %v1351, %v1350
        %v1353 = vrot.slane %v1333, 2
        %v1354 = vsel %vm573, %v1353, %v1352
        %v1355 = vrot.slane %v1334, 1
        %v1356 = vsel %vm576, %v1355, %v1354
        %v1358 = vsub.f32 %v1235, %v1356
        %v1359 = vmul.f32 %v1358, 1.442695
        %v1360 = vpow.pop %v1359
        %v1361 = vlaneseq
        %v1362 = vshrl.u32 %v1361, 7
        %v1363 = vsub.s32 0, %v1362
        %v1364 = vrot.slane %v1327, %v1363
        %v1365 = vlaneseq
        %v1366 = vshrl.u32 %v1365, 7
        %v1367 = vsub.s32 0, %v1366
        %v1368 = vrot.slane %v1328, %v1367
        %v1369 = vlaneseq
        %v1370 = vshrl.u32 %v1369, 7
        %v1371 = vsub.s32 0, %v1370
        %v1372 = vrot.slane %v1329, %v1371
        %v1373 = vlaneseq
        %v1374 = vshrl.u32 %v1373, 7
        %v1375 = vsub.s32 0, %v1374
        %v1376 = vrot.slane %v1330, %v1375
        %v1377 = vlaneseq
        %v1378 = vshrl.u32 %v1377, 7
        %v1379 = vsub.s32 0, %v1378
        %v1380 = vrot.slane %v1331, %v1379
        %v1381 = vlaneseq
        %v1382 = vshrl.u32 %v1381, 7
        %v1383 = vsub.s32 0, %v1382
        %v1384 = vrot.slane %v1332, %v1383
        %v1385 = vlaneseq
        %v1386 = vshrl.u32 %v1385, 7
        %v1387 = vsub.s32 0, %v1386
        %v1388 = vrot.slane %v1333, %v1387
        %v1389 = vlaneseq
        %v1390 = vshrl.u32 %v1389, 7
        %v1391 = vsub.s32 0, %v1390
        %v1392 = vrot.slane %v1334, %v1391
        %v1393 = vsub.f32 %v1081, %v1364
        %v1394 = vsub.f32 %v1086, %v1364
        %v1395 = vsub.f32 %v1091, %v1368
        %v1396 = vsub.f32 %v1096, %v1368
        %v1397 = vsub.f32 %v1101, %v1372
        %v1398 = vsub.f32 %v1106, %v1372
        %v1399 = vsub.f32 %v1111, %v1376
        %v1400 = vsub.f32 %v1116, %v1376
        %v1401 = vsub.f32 %v1121, %v1380
        %v1402 = vsub.f32 %v1126, %v1380
        %v1403 = vsub.f32 %v1131, %v1384
        %v1404 = vsub.f32 %v1136, %v1384
        %v1405 = vsub.f32 %v1141, %v1388
        %v1406 = vsub.f32 %v1146, %v1388
        %v1407 = vsub.f32 %v1151, %v1392
        %v1408 = vsub.f32 %v1156, %v1392
        %v1409 = vmul.f32 %v1393, 1.442695
        %v1410 = vpow.pop %v1409
        %v1411 = vmul.f32 %v1394, 1.442695
        %v1412 = vpow.pop %v1411
        %v1413 = vmul.f32 %v1395, 1.442695
        %v1414 = vpow.pop %v1413
        %v1415 = vmul.f32 %v1396, 1.442695
        %v1416 = vpow.pop %v1415
        %v1417 = vmul.f32 %v1397, 1.442695
        %v1418 = vpow.pop %v1417
        %v1419 = vmul.f32 %v1398, 1.442695
        %v1420 = vpow.pop %v1419
        %v1421 = vmul.f32 %v1399, 1.442695
        %v1422 = vpow.pop %v1421
        %v1423 = vmul.f32 %v1400, 1.442695
        %v1424 = vpow.pop %v1423
        %v1425 = vmul.f32 %v1401, 1.442695
        %v1426 = vpow.pop %v1425
        %v1427 = vmul.f32 %v1402, 1.442695
        %v1428 = vpow.pop %v1427
        %v1429 = vmul.f32 %v1403, 1.442695
        %v1430 = vpow.pop %v1429
        %v1431 = vmul.f32 %v1404, 1.442695
        %v1432 = vpow.pop %v1431
        %v1433 = vmul.f32 %v1405, 1.442695
        %v1434 = vpow.pop %v1433
        %v1435 = vmul.f32 %v1406, 1.442695
        %v1436 = vpow.pop %v1435
        %v1437 = vmul.f32 %v1407, 1.442695
        %v1438 = vpow.pop %v1437
        %v1439 = vmul.f32 %v1408, 1.442695
        %v1440 = vpow.pop %v1439
        %v1441 = vsel %vm1238, %v1410, 0.0
        %v1442 = vsel %vm1238, %v1412, 0.0
        %v1443 = vadd.f32 %v1441, %v1442
        %v1444 = vrot.slane %v1443, 4
        %v1445 = vadd.f32 %v1443, %v1444
        %v1446 = vrot.slane %v1445, 2
        %v1447 = vadd.f32 %v1445, %v1446
        %v1448 = vrot.slane %v1447, 1
        %v1449 = vadd.f32 %v1447, %v1448
        %v1450 = vsel %vm1238, %v1414, 0.0
        %v1451 = vsel %vm1238, %v1416, 0.0
        %v1452 = vadd.f32 %v1450, %v1451
        %v1453 = vrot.slane %v1452, 4
        %v1454 = vadd.f32 %v1452, %v1453
        %v1455 = vrot.slane %v1454, 2
        %v1456 = vadd.f32 %v1454, %v1455
        %v1457 = vrot.slane %v1456, 1
        %v1458 = vadd.f32 %v1456, %v1457
        %v1459 = vsel %vm1238, %v1418, 0.0
        %v1460 = vsel %vm1238, %v1420, 0.0
        %v1461 = vadd.f32 %v1459, %v1460
        %v1462 = vrot.slane %v1461, 4
        %v1463 = vadd.f32 %v1461, %v1462
        %v1464 = vrot.slane %v1463, 2
        %v1465 = vadd.f32 %v1463, %v1464
        %v1466 = vrot.slane %v1465, 1
        %v1467 = vadd.f32 %v1465, %v1466
        %v1468 = vsel %vm1238, %v1422, 0.0
        %v1469 = vsel %vm1238, %v1424, 0.0
        %v1470 = vadd.f32 %v1468, %v1469
        %v1471 = vrot.slane %v1470, 4
        %v1472 = vadd.f32 %v1470, %v1471
        %v1473 = vrot.slane %v1472, 2
        %v1474 = vadd.f32 %v1472, %v1473
        %v1475 = vrot.slane %v1474, 1
        %v1476 = vadd.f32 %v1474, %v1475
        %v1477 = vsel %vm1238, %v1426, 0.0
        %v1478 = vsel %vm1238, %v1428, 0.0
        %v1479 = vadd.f32 %v1477, %v1478
        %v1480 = vrot.slane %v1479, 4
        %v1481 = vadd.f32 %v1479, %v1480
        %v1482 = vrot.slane %v1481, 2
        %v1483 = vadd.f32 %v1481, %v1482
        %v1484 = vrot.slane %v1483, 1
        %v1485 = vadd.f32 %v1483, %v1484
        %v1486 = vsel %vm1238, %v1430, 0.0
        %v1487 = vsel %vm1238, %v1432, 0.0
        %v1488 = vadd.f32 %v1486, %v1487
        %v1489 = vrot.slane %v1488, 4
        %v1490 = vadd.f32 %v1488, %v1489
        %v1491 = vrot.slane %v1490, 2
        %v1492 = vadd.f32 %v1490, %v1491
        %v1493 = vrot.slane %v1492, 1
        %v1494 = vadd.f32 %v1492, %v1493
        %v1495 = vsel %vm1238, %v1434, 0.0
        %v1496 = vsel %vm1238, %v1436, 0.0
        %v1497 = vadd.f32 %v1495, %v1496
        %v1498 = vrot.slane %v1497, 4
        %v1499 = vadd.f32 %v1497, %v1498
        %v1500 = vrot.slane %v1499, 2
        %v1501 = vadd.f32 %v1499, %v1500
        %v1502 = vrot.slane %v1501, 1
        %v1503 = vadd.f32 %v1501, %v1502
        %v1504 = vsel %vm1238, %v1438, 0.0
        %v1505 = vsel %vm1238, %v1440, 0.0
        %v1506 = vadd.f32 %v1504, %v1505
        %v1507 = vrot.slane %v1506, 4
        %v1508 = vadd.f32 %v1506, %v1507
        %v1509 = vrot.slane %v1508, 2
        %v1510 = vadd.f32 %v1508, %v1509
        %v1511 = vrot.slane %v1510, 1
        %v1512 = vadd.f32 %v1510, %v1511
        %v1521 = vsel %vm558, %v1458, %v1449
        %v1522 = vsel %vm561, %v1467, %v1521
        %v1523 = vsel %vm564, %v1476, %v1522
        %v1524 = vsel %vm567, %v1485, %v1523
        %v1525 = vsel %vm570, %v1494, %v1524
        %v1526 = vsel %vm573, %v1503, %v1525
        %v1527 = vsel %vm576, %v1512, %v1526
        %v1529 = vadd.f32 %v1360, %v1527
        %v1530 = vrcp.pop %v1529
        %v1531 = vmul.f32 %v1360, %v1530
        %v1533 = vcombine.high %v1530, %v1530
        %v1535 = vunpack.c.l.s4 1966171168
        %v1536 = vunpack.c.0.s8 %v1535
        %v1537 = vlaneseq
        %v1538 = vshrl.u32 %v1537, 7
        %v1539 = vsub.s32 %v1536, %v1538
        %v1540 = vrot.slane %v1530, %v1539
        %v1542 = vunpack.c.l.s4 1966171168
        %v1543 = vunpack.c.0.s8 %v1542
        %v1544 = vlaneseq
        %v1545 = vshrl.u32 %v1544, 7
        %v1546 = vsub.s32 %v1543, %v1545
        %v1547 = vrot.slane %v1533, %v1546
        %v1548 = vcombine.high %v1540, %v1540
        %v1549 = vcombine.high %v1547, %v1547
        %v1551 = vunpack.c.l.s4 1966171168
        %v1552 = vunpack.c.0.s8 %v1551
        %v1553 = vlaneseq
        %v1554 = vshrl.u32 %v1553, 7
        %v1555 = vsub.s32 %v1552, %v1554
        %v1556 = vrot.slane %v1540, %v1555
        %v1558 = vunpack.c.l.s4 1966171168
        %v1559 = vunpack.c.0.s8 %v1558
        %v1560 = vlaneseq
        %v1561 = vshrl.u32 %v1560, 7
        %v1562 = vsub.s32 %v1559, %v1561
        %v1563 = vrot.slane %v1547, %v1562
        %v1565 = vunpack.c.l.s4 1966171168
        %v1566 = vunpack.c.0.s8 %v1565
        %v1567 = vlaneseq
        %v1568 = vshrl.u32 %v1567, 7
        %v1569 = vsub.s32 %v1566, %v1568
        %v1570 = vrot.slane %v1548, %v1569
        %v1572 = vunpack.c.l.s4 1966171168
        %v1573 = vunpack.c.0.s8 %v1572
        %v1574 = vlaneseq
        %v1575 = vshrl.u32 %v1574, 7
        %v1576 = vsub.s32 %v1573, %v1575
        %v1577 = vrot.slane %v1549, %v1576
        %v1578 = vcombine.high %v1556, %v1556
        %v1579 = vcombine.high %v1563, %v1563
        %v1580 = vcombine.high %v1570, %v1570
        %v1581 = vcombine.high %v1577, %v1577
        %v1582 = vlaneseq
        %v1583 = vshrl.u32 %v1582, 7
        %v1584 = vsub.s32 0, %v1583
        %v1585 = vrot.slane %v1556, %v1584
        %v1586 = vlaneseq
        %v1587 = vshrl.u32 %v1586, 7
        %v1588 = vsub.s32 0, %v1587
        %v1589 = vrot.slane %v1570, %v1588
        %v1590 = vlaneseq
        %v1591 = vshrl.u32 %v1590, 7
        %v1592 = vsub.s32 0, %v1591
        %v1593 = vrot.slane %v1578, %v1592
        %v1594 = vlaneseq
        %v1595 = vshrl.u32 %v1594, 7
        %v1596 = vsub.s32 0, %v1595
        %v1597 = vrot.slane %v1580, %v1596
        %v1598 = vlaneseq
        %v1599 = vshrl.u32 %v1598, 7
        %v1600 = vsub.s32 0, %v1599
        %v1601 = vrot.slane %v1563, %v1600
        %v1602 = vlaneseq
        %v1603 = vshrl.u32 %v1602, 7
        %v1604 = vsub.s32 0, %v1603
        %v1605 = vrot.slane %v1577, %v1604
        %v1606 = vlaneseq
        %v1607 = vshrl.u32 %v1606, 7
        %v1608 = vsub.s32 0, %v1607
        %v1609 = vrot.slane %v1579, %v1608
        %v1610 = vlaneseq
        %v1611 = vshrl.u32 %v1610, 7
        %v1612 = vsub.s32 0, %v1611
        %v1613 = vrot.slane %v1581, %v1612
        %v1622 = vmul.f32 %v1410, %v1585
        %v1623 = vmul.f32 %v1412, %v1585
        %v1624 = vmul.f32 %v1414, %v1589
        %v1625 = vmul.f32 %v1416, %v1589
        %v1626 = vmul.f32 %v1418, %v1593
        %v1627 = vmul.f32 %v1420, %v1593
        %v1628 = vmul.f32 %v1422, %v1597
        %v1629 = vmul.f32 %v1424, %v1597
        %v1630 = vmul.f32 %v1426, %v1601
        %v1631 = vmul.f32 %v1428, %v1601
        %v1632 = vmul.f32 %v1430, %v1605
        %v1633 = vmul.f32 %v1432, %v1605
        %v1634 = vmul.f32 %v1434, %v1609
        %v1635 = vmul.f32 %v1436, %v1609
        %v1636 = vmul.f32 %v1438, %v1613
        %v1637 = vmul.f32 %v1440, %v1613
        %v1639 = vsel %vm1238, %v1622, 0
        %v1642 = vsel %vm1238, %v1623, 0
        %v1645 = vsel %vm1238, %v1624, 0
        %v1648 = vsel %vm1238, %v1625, 0
        %v1651 = vsel %vm1238, %v1626, 0
        %v1654 = vsel %vm1238, %v1627, 0
        %v1657 = vsel %vm1238, %v1628, 0
        %v1660 = vsel %vm1238, %v1629, 0
        %v1663 = vsel %vm1238, %v1630, 0
        %v1666 = vsel %vm1238, %v1631, 0
        %v1669 = vsel %vm1238, %v1632, 0
        %v1672 = vsel %vm1238, %v1633, 0
        %v1675 = vsel %vm1238, %v1634, 0
        %v1678 = vsel %vm1238, %v1635, 0
        %v1681 = vsel %vm1238, %v1636, 0
        %v1684 = vsel %vm1238, %v1637, 0
        %vm1686 = vcmask 1043456
        %v1688 = vsel %vm1686, %v859, 0
        %1690 = vmatprep.subr.mxu0 0.0
        %1691 = vmatpush1.msra.mxu0 %v1688
        %1692 = vmatprep.subr.mxu0 0.0
        %1693 = vmatpush1.msra.mxu0 0.0
        %1694 = vmatprep.subr.mxu0 0.0
        %1695 = vmatpush1.msra.mxu0 0.0
        %1696 = vmatprep.subr.mxu0 0.0
        %1697 = vmatpush1.msra.mxu0 0.0
        %1698 = vmatprep.subr.mxu0 0.0
        %1699 = vmatpush1.msra.mxu0 0.0
        %1700 = vmatprep.subr.mxu0 0.0
        %1701 = vmatpush1.msra.mxu0 0.0
        %1702 = vmatprep.subr.mxu0 0.0
        %1703 = vmatpush1.msra.mxu0 0.0
        %1704 = vmatprep.subr.mxu0 0.0
        %1705 = vmatpush1.msra.mxu0 0.0
        %1706 = vmatprep.subr.mxu0 0.0
        %1707 = vmatpush1.msra.mxu0 0.0
        %1708 = vmatprep.subr.mxu0 0.0
        %1709 = vmatpush1.msra.mxu0 0.0
        %1710 = vmatprep.subr.mxu0 0.0
        %1711 = vmatpush1.msra.mxu0 0.0
        %1712 = vmatprep.subr.mxu0 0.0
        %1713 = vmatpush1.msra.mxu0 0.0
        %1714 = vmatprep.subr.mxu0 0.0
        %1715 = vmatpush1.msra.mxu0 0.0
        %1716 = vmatprep.subr.mxu0 0.0
        %1717 = vmatpush1.msra.mxu0 0.0
        %1718 = vmatprep.subr.mxu0 0.0
        %1719 = vmatpush1.msra.mxu0 0.0
        %1720 = vmatprep.subr.mxu0 0.0
        %1721 = vmatpush1.msra.mxu0 0.0
        %1722 = vmatprep.subr.mxu0 0.0
        %1723 = vmatpush1.msra.mxu0 0.0
        %1724 = vmatprep.subr.mxu0 0.0
        %1725 = vmatpush1.msra.mxu0 0.0
        %1726 = vmatprep.subr.mxu0 0.0
        %1727 = vmatpush1.msra.mxu0 0.0
        %1728 = vmatprep.subr.mxu0 0.0
        %1729 = vmatpush1.msra.mxu0 0.0
        %1730 = vmatprep.subr.mxu0 0.0
        %1731 = vmatpush1.msra.mxu0 0.0
        %1732 = vmatprep.subr.mxu0 0.0
        %1733 = vmatpush1.msra.mxu0 0.0
        %1734 = vmatprep.subr.mxu0 0.0
        %1735 = vmatpush1.msra.mxu0 0.0
        %1736 = vmatprep.subr.mxu0 0.0
        %1737 = vmatpush1.msra.mxu0 0.0
        %1738 = vmatprep.subr.mxu0 0.0
        %1739 = vmatpush1.msra.mxu0 0.0
        %1740 = vmatprep.subr.mxu0 0.0
        %1741 = vmatpush1.msra.mxu0 0.0
        %1742 = vmatprep.subr.mxu0 0.0
        %1743 = vmatpush1.msra.mxu0 0.0
        %1744 = vmatprep.subr.mxu0 0.0
        %1745 = vmatpush1.msra.mxu0 0.0
        %1746 = vmatprep.subr.mxu0 0.0
        %1747 = vmatpush1.msra.mxu0 0.0
        %1748 = vmatprep.subr.mxu0 0.0
        %1749 = vmatpush1.msra.mxu0 0.0
        %1750 = vmatprep.subr.mxu0 0.0
        %1751 = vmatpush1.msra.mxu0 0.0
        %1752 = vmatprep.subr.mxu0 0.0
        %1753 = vmatpush1.msra.mxu0 0.0
        %1754 = vmatprep.mubr.f32.mxu0 0.0
        %1755 = vmatmul.mubr.f32.gmra.mrb[0].mxu0 %v1639
        %v1756 = vpop.f32.mrb[0].mxu0
        %v1757 = vadd.f32 0.0, %v1756
        %v1758 = vpop.f32.mrb[0].mxu0
        %1759 = vmatprep.mubr.f32.mxu0 0.0
        %1760 = vmatmul.mubr.f32.gmra.mrb[0].mxu0 %v1642
        %v1761 = vpop.f32.mrb[0].mxu0
        %v1762 = vadd.f32 0.0, %v1761
        %v1763 = vpop.f32.mrb[0].mxu0
        %1764 = vmatprep.mubr.f32.mxu0 0.0
        %1765 = vmatmul.mubr.f32.gmra.mrb[0].mxu0 %v1645
        %v1766 = vpop.f32.mrb[0].mxu0
        %v1767 = vadd.f32 0.0, %v1766
        %v1768 = vpop.f32.mrb[0].mxu0
        %1769 = vmatprep.mubr.f32.mxu0 0.0
        %1770 = vmatmul.mubr.f32.gmra.mrb[0].mxu0 %v1648
        %v1771 = vpop.f32.mrb[0].mxu0
        %v1772 = vadd.f32 0.0, %v1771
        %v1773 = vpop.f32.mrb[0].mxu0
        %1774 = vmatprep.mubr.f32.mxu0 0.0
        %1775 = vmatmul.mubr.f32.gmra.mrb[0].mxu0 %v1651
        %v1776 = vpop.f32.mrb[0].mxu0
        %v1777 = vadd.f32 0.0, %v1776
        %v1778 = vpop.f32.mrb[0].mxu0
        %1779 = vmatprep.mubr.f32.mxu0 0.0
        %1780 = vmatmul.mubr.f32.gmra.mrb[0].mxu0 %v1654
        %v1781 = vpop.f32.mrb[0].mxu0
        %v1782 = vadd.f32 0.0, %v1781
        %v1783 = vpop.f32.mrb[0].mxu0
        %1784 = vmatprep.mubr.f32.mxu0 0.0
        %1785 = vmatmul.mubr.f32.gmra.mrb[0].mxu0 %v1657
        %v1786 = vpop.f32.mrb[0].mxu0
        %v1787 = vadd.f32 0.0, %v1786
        %v1788 = vpop.f32.mrb[0].mxu0
        %1789 = vmatprep.mubr.f32.mxu0 0.0
        %1790 = vmatmul.mubr.f32.gmra.mrb[0].mxu0 %v1660
        %v1791 = vpop.f32.mrb[0].mxu0
        %v1792 = vadd.f32 0.0, %v1791
        %v1793 = vpop.f32.mrb[0].mxu0
        %1794 = vmatprep.mubr.f32.mxu0 0.0
        %1795 = vmatmul.mubr.f32.gmra.mrb[0].mxu0 %v1663
        %v1796 = vpop.f32.mrb[0].mxu0
        %v1797 = vadd.f32 0.0, %v1796
        %v1798 = vpop.f32.mrb[0].mxu0
        %1799 = vmatprep.mubr.f32.mxu0 0.0
        %1800 = vmatmul.mubr.f32.gmra.mrb[0].mxu0 %v1666
        %v1801 = vpop.f32.mrb[0].mxu0
        %v1802 = vadd.f32 0.0, %v1801
        %v1803 = vpop.f32.mrb[0].mxu0
        %1804 = vmatprep.mubr.f32.mxu0 0.0
        %1805 = vmatmul.mubr.f32.gmra.mrb[0].mxu0 %v1669
        %v1806 = vpop.f32.mrb[0].mxu0
        %v1807 = vadd.f32 0.0, %v1806
        %v1808 = vpop.f32.mrb[0].mxu0
        %1809 = vmatprep.mubr.f32.mxu0 0.0
        %1810 = vmatmul.mubr.f32.gmra.mrb[0].mxu0 %v1672
        %v1811 = vpop.f32.mrb[0].mxu0
        %v1812 = vadd.f32 0.0, %v1811
        %v1813 = vpop.f32.mrb[0].mxu0
        %1814 = vmatprep.mubr.f32.mxu0 0.0
        %1815 = vmatmul.mubr.f32.gmra.mrb[0].mxu0 %v1675
        %v1816 = vpop.f32.mrb[0].mxu0
        %v1817 = vadd.f32 0.0, %v1816
        %v1818 = vpop.f32.mrb[0].mxu0
        %1819 = vmatprep.mubr.f32.mxu0 0.0
        %1820 = vmatmul.mubr.f32.gmra.mrb[0].mxu0 %v1678
        %v1821 = vpop.f32.mrb[0].mxu0
        %v1822 = vadd.f32 0.0, %v1821
        %v1823 = vpop.f32.mrb[0].mxu0
        %1824 = vmatprep.mubr.f32.mxu0 0.0
        %1825 = vmatmul.mubr.f32.gmra.mrb[0].mxu0 %v1681
        %v1826 = vpop.f32.mrb[0].mxu0
        %v1827 = vadd.f32 0.0, %v1826
        %v1828 = vpop.f32.mrb[0].mxu0
        %1829 = vmatprep.mubr.f32.mxu0 0.0
        %1830 = vmatmul.mubr.f32.gmra.mrb[0].mxu0 %v1684
        %v1831 = vpop.f32.mrb[0].mxu0
        %v1832 = vadd.f32 0.0, %v1831
        %v1833 = vpop.f32.mrb[0].mxu0
        %1834 = vdwg.mxu0
        %v1836 = vsel %vm1238, %v1531, 0
        %1838 = vmatprep.subr.mxu0 0.0
        %1839 = vmatpush1.msra.mxu0 %v1688
        %1840 = vmatprep.subr.mxu0 0.0
        %1841 = vmatpush1.msra.mxu0 0.0
        %1842 = vmatprep.subr.mxu0 0.0
        %1843 = vmatpush1.msra.mxu0 0.0
        %1844 = vmatprep.subr.mxu0 0.0
        %1845 = vmatpush1.msra.mxu0 0.0
        %1846 = vmatprep.subr.mxu0 0.0
        %1847 = vmatpush1.msra.mxu0 0.0
        %1848 = vmatprep.subr.mxu0 0.0
        %1849 = vmatpush1.msra.mxu0 0.0
        %1850 = vmatprep.subr.mxu0 0.0
        %1851 = vmatpush1.msra.mxu0 0.0
        %1852 = vmatprep.subr.mxu0 0.0
        %1853 = vmatpush1.msra.mxu0 0.0
        %1854 = vmatprep.subr.mxu0 0.0
        %1855 = vmatpush1.msra.mxu0 0.0
        %1856 = vmatprep.subr.mxu0 0.0
        %1857 = vmatpush1.msra.mxu0 0.0
        %1858 = vmatprep.subr.mxu0 0.0
        %1859 = vmatpush1.msra.mxu0 0.0
        %1860 = vmatprep.subr.mxu0 0.0
        %1861 = vmatpush1.msra.mxu0 0.0
        %1862 = vmatprep.subr.mxu0 0.0
        %1863 = vmatpush1.msra.mxu0 0.0
        %1864 = vmatprep.subr.mxu0 0.0
        %1865 = vmatpush1.msra.mxu0 0.0
        %1866 = vmatprep.subr.mxu0 0.0
        %1867 = vmatpush1.msra.mxu0 0.0
        %1868 = vmatprep.subr.mxu0 0.0
        %1869 = vmatpush1.msra.mxu0 0.0
        %1870 = vmatprep.subr.mxu0 0.0
        %1871 = vmatpush1.msra.mxu0 0.0
        %1872 = vmatprep.subr.mxu0 0.0
        %1873 = vmatpush1.msra.mxu0 0.0
        %1874 = vmatprep.subr.mxu0 0.0
        %1875 = vmatpush1.msra.mxu0 0.0
        %1876 = vmatprep.subr.mxu0 0.0
        %1877 = vmatpush1.msra.mxu0 0.0
        %1878 = vmatprep.subr.mxu0 0.0
        %1879 = vmatpush1.msra.mxu0 0.0
        %1880 = vmatprep.subr.mxu0 0.0
        %1881 = vmatpush1.msra.mxu0 0.0
        %1882 = vmatprep.subr.mxu0 0.0
        %1883 = vmatpush1.msra.mxu0 0.0
        %1884 = vmatprep.subr.mxu0 0.0
        %1885 = vmatpush1.msra.mxu0 0.0
        %1886 = vmatprep.subr.mxu0 0.0
        %1887 = vmatpush1.msra.mxu0 0.0
        %1888 = vmatprep.subr.mxu0 0.0
        %1889 = vmatpush1.msra.mxu0 0.0
        %1890 = vmatprep.subr.mxu0 0.0
        %1891 = vmatpush1.msra.mxu0 0.0
        %1892 = vmatprep.subr.mxu0 0.0
        %1893 = vmatpush1.msra.mxu0 0.0
        %1894 = vmatprep.subr.mxu0 0.0
        %1895 = vmatpush1.msra.mxu0 0.0
        %1896 = vmatprep.subr.mxu0 0.0
        %1897 = vmatpush1.msra.mxu0 0.0
        %1898 = vmatprep.subr.mxu0 0.0
        %1899 = vmatpush1.msra.mxu0 0.0
        %1900 = vmatprep.subr.mxu0 0.0
        %1901 = vmatpush1.msra.mxu0 0.0
        %1902 = vmatprep.mubr.f32.mxu0 0.0
        %1903 = vmatmul.mubr.f32.gmra.mrb[0].mxu0 %v1836
        %v1904 = vpop.f32.mrb[0].mxu0
        %v1905 = vadd.f32 0.0, %v1904
        %v1906 = vpop.f32.mrb[0].mxu0
        %1907 = vdwg.mxu0
        %1924 = vrot.lane.b32.xlu0 %v777, 96
        %v1925 = vpop.permute.xlu0 %1924
        %1926 = vrot.lane.b32.xlu0 %v782, 96
        %v1927 = vpop.permute.xlu0 %1926
        %1928 = vrot.lane.b32.xlu0 %v787, 96
        %v1929 = vpop.permute.xlu0 %1928
        %1930 = vrot.lane.b32.xlu0 %v792, 96
        %v1931 = vpop.permute.xlu0 %1930
        %1932 = vrot.lane.b32.xlu0 %v797, 96
        %v1933 = vpop.permute.xlu0 %1932
        %1934 = vrot.lane.b32.xlu0 %v802, 96
        %v1935 = vpop.permute.xlu0 %1934
        %1936 = vrot.lane.b32.xlu0 %v807, 96
        %v1937 = vpop.permute.xlu0 %1936
        %1938 = vrot.lane.b32.xlu0 %v812, 96
        %v1939 = vpop.permute.xlu0 %1938
        %1940 = vrot.lane.b32.xlu0 %v817, 96
        %v1941 = vpop.permute.xlu0 %1940
        %1942 = vrot.lane.b32.xlu0 %v822, 96
        %v1943 = vpop.permute.xlu0 %1942
        %1944 = vrot.lane.b32.xlu0 %v827, 96
        %v1945 = vpop.permute.xlu0 %1944
        %1946 = vrot.lane.b32.xlu0 %v832, 96
        %v1947 = vpop.permute.xlu0 %1946
        %1948 = vrot.lane.b32.xlu0 %v837, 96
        %v1949 = vpop.permute.xlu0 %1948
        %1950 = vrot.lane.b32.xlu0 %v842, 96
        %v1951 = vpop.permute.xlu0 %1950
        %1952 = vrot.lane.b32.xlu0 %v847, 96
        %v1953 = vpop.permute.xlu0 %1952
        %1954 = vrot.lane.b32.xlu0 %v852, 96
        %v1955 = vpop.permute.xlu0 %1954
        %v1972 = vmul.f32 %v1757, %v1925
        %v1973 = vmul.f32 %v1762, %v1927
        %v1974 = vmul.f32 %v1767, %v1929
        %v1975 = vmul.f32 %v1772, %v1931
        %v1976 = vmul.f32 %v1777, %v1933
        %v1977 = vmul.f32 %v1782, %v1935
        %v1978 = vmul.f32 %v1787, %v1937
        %v1979 = vmul.f32 %v1792, %v1939
        %v1980 = vmul.f32 %v1797, %v1941
        %v1981 = vmul.f32 %v1802, %v1943
        %v1982 = vmul.f32 %v1807, %v1945
        %v1983 = vmul.f32 %v1812, %v1947
        %v1984 = vmul.f32 %v1817, %v1949
        %v1985 = vmul.f32 %v1822, %v1951
        %v1986 = vmul.f32 %v1827, %v1953
        %v1987 = vmul.f32 %v1832, %v1955
        %v1988 = vsel %vm423, %v1972, 0.0
        %v1989 = vsel %vm423, %v1973, 0.0
        %v1990 = vadd.f32 %v1988, %v1989
        %v1991 = vrot.slane %v1990, 4
        %v1992 = vadd.f32 %v1990, %v1991
        %v1993 = vrot.slane %v1992, 2
        %v1994 = vadd.f32 %v1992, %v1993
        %v1995 = vrot.slane %v1994, 1
        %v1996 = vadd.f32 %v1994, %v1995
        %v1997 = vsel %vm423, %v1974, 0.0
        %v1998 = vsel %vm423, %v1975, 0.0
        %v1999 = vadd.f32 %v1997, %v1998
        %v2000 = vrot.slane %v1999, 4
        %v2001 = vadd.f32 %v1999, %v2000
        %v2002 = vrot.slane %v2001, 2
        %v2003 = vadd.f32 %v2001, %v2002
        %v2004 = vrot.slane %v2003, 1
        %v2005 = vadd.f32 %v2003, %v2004
        %v2006 = vsel %vm423, %v1976, 0.0
        %v2007 = vsel %vm423, %v1977, 0.0
        %v2008 = vadd.f32 %v2006, %v2007
        %v2009 = vrot.slane %v2008, 4
        %v2010 = vadd.f32 %v2008, %v2009
        %v2011 = vrot.slane %v2010, 2
        %v2012 = vadd.f32 %v2010, %v2011
        %v2013 = vrot.slane %v2012, 1
        %v2014 = vadd.f32 %v2012, %v2013
        %v2015 = vsel %vm423, %v1978, 0.0
        %v2016 = vsel %vm423, %v1979, 0.0
        %v2017 = vadd.f32 %v2015, %v2016
        %v2018 = vrot.slane %v2017, 4
        %v2019 = vadd.f32 %v2017, %v2018
        %v2020 = vrot.slane %v2019, 2
        %v2021 = vadd.f32 %v2019, %v2020
        %v2022 = vrot.slane %v2021, 1
        %v2023 = vadd.f32 %v2021, %v2022
        %v2024 = vsel %vm423, %v1980, 0.0
        %v2025 = vsel %vm423, %v1981, 0.0
        %v2026 = vadd.f32 %v2024, %v2025
        %v2027 = vrot.slane %v2026, 4
        %v2028 = vadd.f32 %v2026, %v2027
        %v2029 = vrot.slane %v2028, 2
        %v2030 = vadd.f32 %v2028, %v2029
        %v2031 = vrot.slane %v2030, 1
        %v2032 = vadd.f32 %v2030, %v2031
        %v2033 = vsel %vm423, %v1982, 0.0
        %v2034 = vsel %vm423, %v1983, 0.0
        %v2035 = vadd.f32 %v2033, %v2034
        %v2036 = vrot.slane %v2035, 4
        %v2037 = vadd.f32 %v2035, %v2036
        %v2038 = vrot.slane %v2037, 2
        %v2039 = vadd.f32 %v2037, %v2038
        %v2040 = vrot.slane %v2039, 1
        %v2041 = vadd.f32 %v2039, %v2040
        %v2042 = vsel %vm423, %v1984, 0.0
        %v2043 = vsel %vm423, %v1985, 0.0
        %v2044 = vadd.f32 %v2042, %v2043
        %v2045 = vrot.slane %v2044, 4
        %v2046 = vadd.f32 %v2044, %v2045
        %v2047 = vrot.slane %v2046, 2
        %v2048 = vadd.f32 %v2046, %v2047
        %v2049 = vrot.slane %v2048, 1
        %v2050 = vadd.f32 %v2048, %v2049
        %v2051 = vsel %vm423, %v1986, 0.0
        %v2052 = vsel %vm423, %v1987, 0.0
        %v2053 = vadd.f32 %v2051, %v2052
        %v2054 = vrot.slane %v2053, 4
        %v2055 = vadd.f32 %v2053, %v2054
        %v2056 = vrot.slane %v2055, 2
        %v2057 = vadd.f32 %v2055, %v2056
        %v2058 = vrot.slane %v2057, 1
        %v2059 = vadd.f32 %v2057, %v2058
        %2061 = vrot.lane.b32.xlu0 %v647, 64
        %v2062 = vpop.permute.xlu0 %2061
        %v2064 = vmul.f32 %v1905, %v2062
        %v2066 = vrot.slane %v2064, 1
        %v2067 = vrot.slane %v2064, 2
        %v2068 = vrot.slane %v2064, 3
        %v2069 = vrot.slane %v2064, 4
        %v2070 = vrot.slane %v2064, 5
        %v2071 = vrot.slane %v2064, 6
        %v2072 = vrot.slane %v2064, 7
        %v2081 = vadd.f32 %v1996, %v2064
        %v2082 = vadd.f32 %v2005, %v2066
        %v2083 = vadd.f32 %v2014, %v2067
        %v2084 = vadd.f32 %v2023, %v2068
        %v2085 = vadd.f32 %v2032, %v2069
        %v2086 = vadd.f32 %v2041, %v2070
        %v2087 = vadd.f32 %v2050, %v2071
        %v2088 = vadd.f32 %v2059, %v2072
        %v2089 = vld [vmem:[%s7] sm:$0xff]
        %v2090 = vld [vmem:[%s7 + $0x8] sm:$0xff]
        %v2091 = vld [vmem:[%s7 + $0x10] sm:$0xff]
        %v2092 = vld [vmem:[%s7 + $0x18] sm:$0xff]
        %v2093 = vld [vmem:[%s8] sm:$0x1]
        %v2095 = vlaneseq
        %v2096 = vshrl.u32 %v2095, 7
        %v2097 = vsub.s32 0, %v2096
        %v2098 = vrot.slane %v2093, %v2097
        %v2108 = vrot.slane %v2082, 7
        %v2109 = vsel %vm558, %v2108, %v2081
        %v2110 = vrot.slane %v2083, 6
        %v2111 = vsel %vm561, %v2110, %v2109
        %v2112 = vrot.slane %v2084, 5
        %v2113 = vsel %vm564, %v2112, %v2111
        %v2114 = vrot.slane %v2085, 4
        %v2115 = vsel %vm567, %v2114, %v2113
        %v2116 = vrot.slane %v2086, 3
        %v2117 = vsel %vm570, %v2116, %v2115
        %v2118 = vrot.slane %v2087, 2
        %v2119 = vsel %vm573, %v2118, %v2117
        %v2120 = vrot.slane %v2088, 1
        %v2121 = vsel %vm576, %v2120, %v2119
        %v2122 = vsel %vm423, %v2121, 0
        %2124 = vmatprep.subr.mxu0 0.0
        %2125 = vmatpush1.msra.mxu0 %v2089
        %2126 = vmatprep.subr.mxu0 0.0
        %2127 = vmatpush1.msra.mxu0 %v2090
        %2128 = vmatprep.subr.mxu0 0.0
        %2129 = vmatpush1.msra.mxu0 %v2091
        %2130 = vmatprep.subr.mxu0 0.0
        %2131 = vmatpush1.msra.mxu0 %v2092
        %2132 = vmatprep.subr.mxu0 0.0
        %2133 = vmatpush1.msra.mxu0 0.0
        %2134 = vmatprep.subr.mxu0 0.0
        %2135 = vmatpush1.msra.mxu0 0.0
        %2136 = vmatprep.subr.mxu0 0.0
        %2137 = vmatpush1.msra.mxu0 0.0
        %2138 = vmatprep.subr.mxu0 0.0
        %2139 = vmatpush1.msra.mxu0 0.0
        %2140 = vmatprep.subr.mxu0 0.0
        %2141 = vmatpush1.msra.mxu0 0.0
        %2142 = vmatprep.subr.mxu0 0.0
        %2143 = vmatpush1.msra.mxu0 0.0
        %2144 = vmatprep.subr.mxu0 0.0
        %2145 = vmatpush1.msra.mxu0 0.0
        %2146 = vmatprep.subr.mxu0 0.0
        %2147 = vmatpush1.msra.mxu0 0.0
        %2148 = vmatprep.subr.mxu0 0.0
        %2149 = vmatpush1.msra.mxu0 0.0
        %2150 = vmatprep.subr.mxu0 0.0
        %2151 = vmatpush1.msra.mxu0 0.0
        %2152 = vmatprep.subr.mxu0 0.0
        %2153 = vmatpush1.msra.mxu0 0.0
        %2154 = vmatprep.subr.mxu0 0.0
        %2155 = vmatpush1.msra.mxu0 0.0
        %2156 = vmatprep.subr.mxu0 0.0
        %2157 = vmatpush1.msra.mxu0 0.0
        %2158 = vmatprep.subr.mxu0 0.0
        %2159 = vmatpush1.msra.mxu0 0.0
        %2160 = vmatprep.subr.mxu0 0.0
        %2161 = vmatpush1.msra.mxu0 0.0
        %2162 = vmatprep.subr.mxu0 0.0
        %2163 = vmatpush1.msra.mxu0 0.0
        %2164 = vmatprep.subr.mxu0 0.0
        %2165 = vmatpush1.msra.mxu0 0.0
        %2166 = vmatprep.subr.mxu0 0.0
        %2167 = vmatpush1.msra.mxu0 0.0
        %2168 = vmatprep.subr.mxu0 0.0
        %2169 = vmatpush1.msra.mxu0 0.0
        %2170 = vmatprep.subr.mxu0 0.0
        %2171 = vmatpush1.msra.mxu0 0.0
        %2172 = vmatprep.subr.mxu0 0.0
        %2173 = vmatpush1.msra.mxu0 0.0
        %2174 = vmatprep.subr.mxu0 0.0
        %2175 = vmatpush1.msra.mxu0 0.0
        %2176 = vmatprep.subr.mxu0 0.0
        %2177 = vmatpush1.msra.mxu0 0.0
        %2178 = vmatprep.subr.mxu0 0.0
        %2179 = vmatpush1.msra.mxu0 0.0
        %2180 = vmatprep.subr.mxu0 0.0
        %2181 = vmatpush1.msra.mxu0 0.0
        %2182 = vmatprep.subr.mxu0 0.0
        %2183 = vmatpush1.msra.mxu0 0.0
        %2184 = vmatprep.subr.mxu0 0.0
        %2185 = vmatpush1.msra.mxu0 0.0
        %2186 = vmatprep.subr.mxu0 0.0
        %2187 = vmatpush1.msra.mxu0 0.0
        %2188 = vmatprep.mubr.f32.mxu0 0.0
        %2189 = vmatmul.mubr.f32.gmra.mrb[0].mxu0 %v2122
        %v2190 = vpop.f32.mrb[0].mxu0
        %v2191 = vadd.f32 %v2098, %v2190
        %v2192 = vpop.f32.mrb[0].mxu0
        %2193 = vdwg.mxu0
        %vm2194 = vcmask 130048
        %2195 = vst.msk [vmem:[%s405] sm:$0xff] %vm2194, %v2191
        %s2196 = sand.u32 %s272, 1
        %s2197 = scalar_lea.sflag [#allocation4], %s2196
        %s2198 = sand.u32 %s272, 1
        %s2199 = smul.addr %s2198, 8
        %s2200 = scalar_lea.vmem [#allocation5], %s2199
        // Predicated region
        $region69: #{tpu_custom_call.1} parent=63 // pred_check
          %p2201 = pneg %p282
        $region70: #{tpu_custom_call.1} parent=63 // pred_check_branch
          %2203 = sbr.rel (%p2201) target = $region72
        $region71: #{tpu_custom_call.1} parent=63 // pred_region
          %s2205 = ssub.s32 128, 128
          %2206 = vsyncadd %s2197, %s2205
          %s2207 = smul.addr %s28, 128
          %s2208 = scalar_lea.hbm %s11, %s2207
          %s2210 = sshll.u32 %s2200, 4
          %s2211 = int_to_ptr.vmem [resolvable:$true] %s2210
          %2213 = dma.vmem_to_hbm [thread:$0]  %s2211, 128, %s2208, %s2197
        $region72: #{tpu_custom_call.1} parent=63 // pred_fallthru
          _
      $region64: #{tpu_custom_call.1} parent=5 // pred_fallthru
        _
      %p2214 = scmp.le.s32.totalorder 2, %s23
      // Predicated region
      $region73: #{tpu_custom_call.1} parent=5 // pred_check
        %p2215 = pneg %p2214
      $region74: #{tpu_custom_call.1} parent=5 // pred_check_branch
        %2217 = sbr.rel (%p2215) target = $region76
      $region75: #{tpu_custom_call.1} parent=5 // pred_region
        %s2218 = ssub.s32 %s23, 2
        // Predicated region
        $region77: #{tpu_custom_call.1} parent=75 // pred_check
          %p2219 = pneg %p288
        $region78: #{tpu_custom_call.1} parent=75 // pred_check_branch
          %2221 = sbr.rel (%p2219) target = $region80
        $region79: #{tpu_custom_call.1} parent=75 // pred_region
          %s2222 = sand.u32 %s273, 1
          %s2223 = scalar_lea.sflag [#allocation4], %s2222
          %s2224 = sand.u32 %s273, 1
          %s2225 = smul.addr %s2224, 8
          %s2226 = scalar_lea.vmem [#allocation5], %s2225
          %2227 = dma.done %s2223, 128
        $region80: #{tpu_custom_call.1} parent=75 // pred_fallthru
          _
      $region76: #{tpu_custom_call.1} parent=5 // pred_fallthru
        _
    $region6: #{tpu_custom_call.1} parent=1 // loop_footer
      %s27 = sadd.s32 1, %s23
    $region7: #{tpu_custom_call.1} parent=1 // loop_footer_branch
      %22 = sbr.rel target = $region3
    $region8: #{tpu_custom_call.1} parent=1 // loop_exit
      _
    %2228 = vsyncpa [#allocation3], 1
    %s2229 = scalar_lea.sflag [#allocation3], 1
    %2230 = vsyncpa %s2229, 1
    %2231 = vsyncpa [#allocation4], 1
    %s2232 = scalar_lea.sflag [#allocation4], 1
    %2233 = vsyncpa %s2232, 1

</llo_original>
